<compile_context>
chip_gen: v7x
topology: tpu7x:2x2x1
jax: 0.10.0
libtpu: 0.0.40
codegen_flags: <defaults>
</compile_context>

<pallas_src>
import jax
import jax.numpy as jnp
from jax.experimental import pallas as pl
from jax.experimental.pallas import tpu as pltpu


# --------------------------- fused forward kernel ---------------------------
def ca1_fused_kernel(x_ref, wih_ref, whh_ref, b_ref, w1_ref, b1_ref,
                     w2_ref, b2_ref, o_ref):
    """Fused forward for one batch tile: LSTM (serial over T) -> MLP -> FC.

    x_ref:  (T, Bt, D)   time-major input tile (VMEM)
    o_ref:  (Bt, N_pad)  lane-padded FC output tile (VMEM)
    """
    T, Bt, D = x_ref.shape
    H = whh_ref.shape[0]

    # ---- Hoisted input projection: one MXU pass covers all T steps ----
    # gx[t*Bt + b, :] = x[t, b, :] @ W_ih + (b_ih + b_hh)
    x2d = x_ref[...].reshape(T * Bt, D)            # leading-dim merge, order preserved
    gx = jnp.dot(x2d, wih_ref[...],
                 preferred_element_type=jnp.float32) + b_ref[...]

    whh = whh_ref[...]

    # Hoisted per-lane pre-scale: gate order (i, f, g, o).  g-lanes get plain
    # tanh; i/f/o lanes use sigmoid(x) = 0.5*(tanh(0.5*x)+1), so a single
    # full-width tanh handles all 4H lanes per step (one EUP push).
    lane = jax.lax.broadcasted_iota(jnp.int32, (1, 4 * H), 1)
    is_g = jnp.logical_and(lane >= 2 * H, lane < 3 * H)
    pre = jnp.where(is_g, 1.0, 0.5).astype(jnp.float32)

    h = jnp.zeros((Bt, H), jnp.float32)
    c = jnp.zeros((Bt, H), jnp.float32)
    hs = []

    # ---- Serial LSTM recurrence (T small & static -> fully unrolled) ----
    # All per-step gx slices are static, sublane-contiguous (8-aligned) blocks.
    # NOTE (v5e): all elementwise gate math stays in f32 (no bf16 VPU/EUP there);
    # 4H == 128 already fills exactly one lane group, so no gate-column padding.
    for t in range(T):
        gates = gx[t * Bt:(t + 1) * Bt, :] + jnp.dot(
            h, whh, preferred_element_type=jnp.float32)
        tg = jnp.tanh(gates * pre)                 # one EUP pass over 4H lanes
        i_g = 0.5 * (tg[:, 0 * H:1 * H] + 1.0)
        f_g = 0.5 * (tg[:, 1 * H:2 * H] + 1.0)
        g_g = tg[:, 2 * H:3 * H]
        o_g = 0.5 * (tg[:, 3 * H:4 * H] + 1.0)
        c = f_g * c + i_g * g_g
        h = o_g * jnp.tanh(c)
        hs.append(h)                               # kept in vregs, no VMEM slab

    # batch_first .view(-1, T*H): row b = [h(t=0), h(t=1), ..., h(t=T-1)]
    h_flat = jnp.concatenate(hs, axis=1)           # (Bt, T*H)

    # ---- MLP: Linear + ReLU (dropout = identity in eval) ----
    m = jnp.dot(h_flat, w1_ref[...],
                preferred_element_type=jnp.float32) + b1_ref[...]
    m = jnp.maximum(m, 0.0)

    # ---- FC: Linear (output columns lane-padded -> unmasked store) ----
    out = jnp.dot(m, w2_ref[...],
                  preferred_element_type=jnp.float32) + b2_ref[...]
    o_ref[...] = out.astype(o_ref.dtype)


# ------------------------------ wrapper -------------------------------------
@jax.jit
def build_ca1_forward(code_input, params):
    """code_input: (B, T, d_feature1), batch-first like the PyTorch module."""
    B, T, D = code_input.shape
    H = params["w_hh_t"].shape[0]
    d_mlp = params["w1"].shape[1]
    n_out = params["w2"].shape[1]

    # Pad batch to a multiple of the f32 sublane tile (8).  Padded rows are
    # independent garbage, sliced off below.
    B_TILE = 8
    B_pad = ((B + B_TILE - 1) // B_TILE) * B_TILE
    x = code_input
    if B_pad != B:
        x = jnp.pad(x, ((0, B_pad - B), (0, 0), (0, 0)))

    # Time-major layout: each kernel step then reads a contiguous 8-row block.
    # The transpose happens in XLA / DMA, not on the kernel's serial path.
    x_tm = jnp.transpose(x, (1, 0, 2))             # (T, B_pad, D)

    # Lane-pad FC output columns so the kernel's final store is lane-dense.
    N_pad = ((n_out + 127) // 128) * 128
    w2p = jnp.pad(params["w2"], ((0, 0), (0, N_pad - n_out)))
    b2p = jnp.pad(params["b2"], ((0, 0), (0, N_pad - n_out)))

    grid = (B_pad // B_TILE,)                      # batch tiles; parallel on v7x
    out = pl.pallas_call(
        ca1_fused_kernel,
        out_shape=jax.ShapeDtypeStruct((B_pad, N_pad), jnp.float32),
        grid_spec=pltpu.PrefetchScalarGridSpec(
            num_scalar_prefetch=0,
            grid=grid,
            in_specs=[
                pl.BlockSpec((T, B_TILE, D), lambda i: (0, i, 0)),   # x (time-major)
                pl.BlockSpec((D, 4 * H), lambda i: (0, 0)),          # W_ih^T
                pl.BlockSpec((H, 4 * H), lambda i: (0, 0)),          # W_hh^T
                pl.BlockSpec((1, 4 * H), lambda i: (0, 0)),          # combined LSTM bias
                pl.BlockSpec((T * H, d_mlp), lambda i: (0, 0)),      # MLP weight
                pl.BlockSpec((1, d_mlp), lambda i: (0, 0)),          # MLP bias
                pl.BlockSpec((d_mlp, N_pad), lambda i: (0, 0)),      # FC weight (lane-padded)
                pl.BlockSpec((1, N_pad), lambda i: (0, 0)),          # FC bias (lane-padded)
            ],
            out_specs=pl.BlockSpec((B_TILE, N_pad), lambda i: (i, 0)),
        ),
        compiler_params=pltpu.CompilerParams(
            dimension_semantics=("parallel",),     # shard batch tiles across cores
        ),
    )(x_tm, params["w_ih_t"], params["w_hh_t"], params["b_lstm"],
      params["w1"], params["b1"], w2p, b2p)

    return out[:B, :n_out]


# ------------------------- pure-JAX reference (check) ------------------------
def reference_forward(code_input, params):
    B, T, D = code_input.shape
    H = params["w_hh_t"].shape[0]
    hp = jax.lax.Precision.HIGHEST

    def step(carry, x_t):
        h, c = carry
        gates = (jnp.dot(x_t, params["w_ih_t"], precision=hp)
                 + jnp.dot(h, params["w_hh_t"], precision=hp)
                 + params["b_lstm"][0])
        i = jax.nn.sigmoid(gates[:, 0 * H:1 * H])
        f = jax.nn.sigmoid(gates[:, 1 * H:2 * H])
        g = jnp.tanh(gates[:, 2 * H:3 * H])
        o = jax.nn.sigmoid(gates[:, 3 * H:4 * H])
        c = f * c + i * g
        h = o * jnp.tanh(c)
        return (h, c), h

    h0 = jnp.zeros((B, H), jnp.float32)
    c0 = jnp.zeros((B, H), jnp.float32)
    _, hs = jax.lax.scan(step, (h0, c0), jnp.swapaxes(code_input, 0, 1))
    h_flat = jnp.swapaxes(hs, 0, 1).reshape(B, T * H)   # batch_first flatten
    m = jnp.maximum(jnp.dot(h_flat, params["w1"], precision=hp) + params["b1"], 0.0)
    return jnp.dot(m, params["w2"], precision=hp) + params["b2"]


# ------------------------------ params --------------------------------------
def init_params(key, d_feature1, d_feature2, d_rnn_outpt, d_mlp, n_out):
    ks = jax.random.split(key, 8)
    H, D = d_feature2, d_feature1
    s = 0.1
    return {
        "w_ih_t": s * jax.random.normal(ks[0], (D, 4 * H), jnp.float32),
        "w_hh_t": s * jax.random.normal(ks[1], (H, 4 * H), jnp.float32),
        "b_lstm": s * jax.random.normal(ks[2], (1, 4 * H), jnp.float32),
        "w1": s * jax.random.normal(ks[3], (d_rnn_outpt, d_mlp), jnp.float32),
        "b1": s * jax.random.normal(ks[4], (1, d_mlp), jnp.float32),
        "w2": s * jax.random.normal(ks[5], (d_mlp, n_out), jnp.float32),
        "b2": s * jax.random.normal(ks[6], (1, n_out), jnp.float32),
    }


if __name__ == "__main__":
    # Small, forward-consistent shapes (type_model = 1, isPhase = False)
    B = 2               # batch
    T = 8               # d_seq
    d_feature1 = 16     # LSTM input features
    d_feature2 = 32     # LSTM hidden size
    d_rnn_outpt = T * d_feature2     # 256 (used by MLP's view(-1, d_rnn_outpt))
    d_mlp = 64
    nNeuron_fc_output = 4
    assert d_rnn_outpt == T * d_feature2

    key = jax.random.PRNGKey(0)
    k_x, k_p = jax.random.split(key)
    code_input = jax.random.normal(k_x, (B, T, d_feature1), jnp.float32)
    params = init_params(k_p, d_feature1, d_feature2, d_rnn_outpt, d_mlp,
                         nNeuron_fc_output)

    out = build_ca1_forward(code_input, params)
    out = jax.block_until_ready(out)
    assert out.shape == (B, nNeuron_fc_output), out.shape

    # Numerical sanity check against a pure-JAX reference (tolerance covers
    # MXU/EUP vs XLA rounding and the tanh-form sigmoid; catches layout/gate bugs).
    ref = jax.block_until_ready(reference_forward(code_input, params))
    assert jnp.allclose(out, ref, rtol=1e-2, atol=1e-2), float(jnp.max(jnp.abs(out - ref)))

    print("KERNEL_OK")
</pallas_src>

<mosaic_0001>
module attributes {stable_mosaic.version = 11 : i64} {
  func.func @ca1_fused_kernel(%arg0: i32, %arg1: memref<8x8x16xf32, #tpu.memory_space<vmem>>, %arg2: memref<16x128xf32, #tpu.memory_space<vmem>>, %arg3: memref<32x128xf32, #tpu.memory_space<vmem>>, %arg4: memref<1x128xf32, #tpu.memory_space<vmem>>, %arg5: memref<256x64xf32, #tpu.memory_space<vmem>>, %arg6: memref<1x64xf32, #tpu.memory_space<vmem>>, %arg7: memref<64x128xf32, #tpu.memory_space<vmem>>, %arg8: memref<1x128xf32, #tpu.memory_space<vmem>>, %arg9: memref<8x128xf32, #tpu.memory_space<vmem>>) attributes {dimension_semantics = [#tpu.dimension_semantics<parallel>], iteration_bounds = array<i64: 1>, scalar_prefetch = 0 : i64, scratch_operands = 0 : i64, tpu.core_type = #tpu.core_type<tc>, window_params = [{transform_indices = @transform_0, window_bounds = array<i64: 8, 8, 16>}, {pipeline_mode = #tpu.pipeline_mode<synchronous>, transform_indices = @transform_1, window_bounds = array<i64: 16, 128>}, {pipeline_mode = #tpu.pipeline_mode<synchronous>, transform_indices = @transform_2, window_bounds = array<i64: 32, 128>}, {pipeline_mode = #tpu.pipeline_mode<synchronous>, transform_indices = @transform_3, window_bounds = array<i64: 1, 128>}, {pipeline_mode = #tpu.pipeline_mode<synchronous>, transform_indices = @transform_4, window_bounds = array<i64: 256, 64>}, {pipeline_mode = #tpu.pipeline_mode<synchronous>, transform_indices = @transform_5, window_bounds = array<i64: 1, 64>}, {pipeline_mode = #tpu.pipeline_mode<synchronous>, transform_indices = @transform_6, window_bounds = array<i64: 64, 128>}, {pipeline_mode = #tpu.pipeline_mode<synchronous>, transform_indices = @transform_7, window_bounds = array<i64: 1, 128>}, {transform_indices = @transform_8, window_bounds = array<i64: 8, 128>}]} {
    %c0 = arith.constant 0 : index
    %c0_0 = arith.constant 0 : index
    %c0_1 = arith.constant 0 : index
    %0 = vector.load %arg1[%c0, %c0_0, %c0_1] : memref<8x8x16xf32, #tpu.memory_space<vmem>>, vector<8x8x16xf32>
    %1 = vector.shape_cast %0 : vector<8x8x16xf32> to vector<64x16xf32>
    %c0_2 = arith.constant 0 : index
    %c0_3 = arith.constant 0 : index
    %2 = vector.load %arg2[%c0_2, %c0_3] : memref<16x128xf32, #tpu.memory_space<vmem>>, vector<16x128xf32>
    %cst = arith.constant dense<0.000000e+00> : vector<64x128xf32>
    %3 = tpu.matmul %1, %2, %cst {dimension_numbers = #tpu.dot_dimension_numbers<[1], [0], [0], [1], [0, 0, 1, 1], [], []>} : vector<64x16xf32>, vector<16x128xf32>, vector<64x128xf32> -> vector<64x128xf32>
    %c0_4 = arith.constant 0 : index
    %c0_5 = arith.constant 0 : index
    %4 = vector.load %arg4[%c0_4, %c0_5] : memref<1x128xf32, #tpu.memory_space<vmem>>, vector<1x128xf32>
    %5 = vector.broadcast %4 : vector<1x128xf32> to vector<64x128xf32>
    %6 = arith.addf %3, %5 : vector<64x128xf32>
    %c0_6 = arith.constant 0 : index
    %c0_7 = arith.constant 0 : index
    %7 = vector.load %arg3[%c0_6, %c0_7] : memref<32x128xf32, #tpu.memory_space<vmem>>, vector<32x128xf32>
    %8 = tpu.iota {dimensions = array<i32: 1>} : vector<1x128xi32>
    %c64_i32 = arith.constant 64 : i32
    %9 = vector.broadcast %c64_i32 : i32 to vector<1x128xi32>
    %10 = arith.cmpi sge, %8, %9 : vector<1x128xi32>
    %c96_i32 = arith.constant 96 : i32
    %11 = vector.broadcast %c96_i32 : i32 to vector<1x128xi32>
    %12 = arith.cmpi slt, %8, %11 : vector<1x128xi32>
    %13 = arith.andi %10, %12 : vector<1x128xi1>
    %cst_8 = arith.constant 1.000000e+00 : f32
    %cst_9 = arith.constant 5.000000e-01 : f32
    %14 = vector.broadcast %cst_8 : f32 to vector<1x128xf32>
    %15 = vector.broadcast %cst_9 : f32 to vector<1x128xf32>
    %16 = arith.select %13, %14, %15 : vector<1x128xi1>, vector<1x128xf32>
    %cst_10 = arith.constant 0.000000e+00 : f32
    %17 = vector.broadcast %cst_10 : f32 to vector<8x32xf32>
    %cst_11 = arith.constant 0.000000e+00 : f32
    %18 = vector.broadcast %cst_11 : f32 to vector<8x32xf32>
    %19 = vector.extract_strided_slice %6 {offsets = [0, 0], sizes = [8, 128], strides = [1, 1]} : vector<64x128xf32> to vector<8x128xf32>
    %cst_12 = arith.constant dense<0.000000e+00> : vector<8x128xf32>
    %20 = tpu.matmul %17, %7, %cst_12 {dimension_numbers = #tpu.dot_dimension_numbers<[1], [0], [0], [1], [0, 0, 1, 1], [], []>} : vector<8x32xf32>, vector<32x128xf32>, vector<8x128xf32> -> vector<8x128xf32>
    %21 = arith.addf %19, %20 : vector<8x128xf32>
    %22 = vector.broadcast %16 : vector<1x128xf32> to vector<8x128xf32>
    %23 = arith.mulf %21, %22 : vector<8x128xf32>
    %24 = math.tanh %23 : vector<8x128xf32>
    %25 = vector.extract_strided_slice %24 {offsets = [0, 0], sizes = [8, 32], strides = [1, 1]} : vector<8x128xf32> to vector<8x32xf32>
    %cst_13 = arith.constant 1.000000e+00 : f32
    %26 = vector.broadcast %cst_13 : f32 to vector<8x32xf32>
    %27 = arith.addf %25, %26 : vector<8x32xf32>
    %cst_14 = arith.constant 5.000000e-01 : f32
    %28 = vector.broadcast %cst_14 : f32 to vector<8x32xf32>
    %29 = arith.mulf %28, %27 : vector<8x32xf32>
    %30 = vector.extract_strided_slice %24 {offsets = [0, 32], sizes = [8, 32], strides = [1, 1]} : vector<8x128xf32> to vector<8x32xf32>
    %cst_15 = arith.constant 1.000000e+00 : f32
    %31 = vector.broadcast %cst_15 : f32 to vector<8x32xf32>
    %32 = arith.addf %30, %31 : vector<8x32xf32>
    %cst_16 = arith.constant 5.000000e-01 : f32
    %33 = vector.broadcast %cst_16 : f32 to vector<8x32xf32>
    %34 = arith.mulf %33, %32 : vector<8x32xf32>
    %35 = vector.extract_strided_slice %24 {offsets = [0, 64], sizes = [8, 32], strides = [1, 1]} : vector<8x128xf32> to vector<8x32xf32>
    %36 = vector.extract_strided_slice %24 {offsets = [0, 96], sizes = [8, 32], strides = [1, 1]} : vector<8x128xf32> to vector<8x32xf32>
    %cst_17 = arith.constant 1.000000e+00 : f32
    %37 = vector.broadcast %cst_17 : f32 to vector<8x32xf32>
    %38 = arith.addf %36, %37 : vector<8x32xf32>
    %cst_18 = arith.constant 5.000000e-01 : f32
    %39 = vector.broadcast %cst_18 : f32 to vector<8x32xf32>
    %40 = arith.mulf %39, %38 : vector<8x32xf32>
    %41 = arith.mulf %34, %18 : vector<8x32xf32>
    %42 = arith.mulf %29, %35 : vector<8x32xf32>
    %43 = arith.addf %41, %42 : vector<8x32xf32>
    %44 = math.tanh %43 : vector<8x32xf32>
    %45 = arith.mulf %40, %44 : vector<8x32xf32>
    %46 = vector.extract_strided_slice %6 {offsets = [8, 0], sizes = [8, 128], strides = [1, 1]} : vector<64x128xf32> to vector<8x128xf32>
    %cst_19 = arith.constant dense<0.000000e+00> : vector<8x128xf32>
    %47 = tpu.matmul %45, %7, %cst_19 {dimension_numbers = #tpu.dot_dimension_numbers<[1], [0], [0], [1], [0, 0, 1, 1], [], []>} : vector<8x32xf32>, vector<32x128xf32>, vector<8x128xf32> -> vector<8x128xf32>
    %48 = arith.addf %46, %47 : vector<8x128xf32>
    %49 = vector.broadcast %16 : vector<1x128xf32> to vector<8x128xf32>
    %50 = arith.mulf %48, %49 : vector<8x128xf32>
    %51 = math.tanh %50 : vector<8x128xf32>
    %52 = vector.extract_strided_slice %51 {offsets = [0, 0], sizes = [8, 32], strides = [1, 1]} : vector<8x128xf32> to vector<8x32xf32>
    %cst_20 = arith.constant 1.000000e+00 : f32
    %53 = vector.broadcast %cst_20 : f32 to vector<8x32xf32>
    %54 = arith.addf %52, %53 : vector<8x32xf32>
    %cst_21 = arith.constant 5.000000e-01 : f32
    %55 = vector.broadcast %cst_21 : f32 to vector<8x32xf32>
    %56 = arith.mulf %55, %54 : vector<8x32xf32>
    %57 = vector.extract_strided_slice %51 {offsets = [0, 32], sizes = [8, 32], strides = [1, 1]} : vector<8x128xf32> to vector<8x32xf32>
    %cst_22 = arith.constant 1.000000e+00 : f32
    %58 = vector.broadcast %cst_22 : f32 to vector<8x32xf32>
    %59 = arith.addf %57, %58 : vector<8x32xf32>
    %cst_23 = arith.constant 5.000000e-01 : f32
    %60 = vector.broadcast %cst_23 : f32 to vector<8x32xf32>
    %61 = arith.mulf %60, %59 : vector<8x32xf32>
    %62 = vector.extract_strided_slice %51 {offsets = [0, 64], sizes = [8, 32], strides = [1, 1]} : vector<8x128xf32> to vector<8x32xf32>
    %63 = vector.extract_strided_slice %51 {offsets = [0, 96], sizes = [8, 32], strides = [1, 1]} : vector<8x128xf32> to vector<8x32xf32>
    %cst_24 = arith.constant 1.000000e+00 : f32
    %64 = vector.broadcast %cst_24 : f32 to vector<8x32xf32>
    %65 = arith.addf %63, %64 : vector<8x32xf32>
    %cst_25 = arith.constant 5.000000e-01 : f32
    %66 = vector.broadcast %cst_25 : f32 to vector<8x32xf32>
    %67 = arith.mulf %66, %65 : vector<8x32xf32>
    %68 = arith.mulf %61, %43 : vector<8x32xf32>
    %69 = arith.mulf %56, %62 : vector<8x32xf32>
    %70 = arith.addf %68, %69 : vector<8x32xf32>
    %71 = math.tanh %70 : vector<8x32xf32>
    %72 = arith.mulf %67, %71 : vector<8x32xf32>
    %73 = vector.extract_strided_slice %6 {offsets = [16, 0], sizes = [8, 128], strides = [1, 1]} : vector<64x128xf32> to vector<8x128xf32>
    %cst_26 = arith.constant dense<0.000000e+00> : vector<8x128xf32>
    %74 = tpu.matmul %72, %7, %cst_26 {dimension_numbers = #tpu.dot_dimension_numbers<[1], [0], [0], [1], [0, 0, 1, 1], [], []>} : vector<8x32xf32>, vector<32x128xf32>, vector<8x128xf32> -> vector<8x128xf32>
    %75 = arith.addf %73, %74 : vector<8x128xf32>
    %76 = vector.broadcast %16 : vector<1x128xf32> to vector<8x128xf32>
    %77 = arith.mulf %75, %76 : vector<8x128xf32>
    %78 = math.tanh %77 : vector<8x128xf32>
    %79 = vector.extract_strided_slice %78 {offsets = [0, 0], sizes = [8, 32], strides = [1, 1]} : vector<8x128xf32> to vector<8x32xf32>
    %cst_27 = arith.constant 1.000000e+00 : f32
    %80 = vector.broadcast %cst_27 : f32 to vector<8x32xf32>
    %81 = arith.addf %79, %80 : vector<8x32xf32>
    %cst_28 = arith.constant 5.000000e-01 : f32
    %82 = vector.broadcast %cst_28 : f32 to vector<8x32xf32>
    %83 = arith.mulf %82, %81 : vector<8x32xf32>
    %84 = vector.extract_strided_slice %78 {offsets = [0, 32], sizes = [8, 32], strides = [1, 1]} : vector<8x128xf32> to vector<8x32xf32>
    %cst_29 = arith.constant 1.000000e+00 : f32
    %85 = vector.broadcast %cst_29 : f32 to vector<8x32xf32>
    %86 = arith.addf %84, %85 : vector<8x32xf32>
    %cst_30 = arith.constant 5.000000e-01 : f32
    %87 = vector.broadcast %cst_30 : f32 to vector<8x32xf32>
    %88 = arith.mulf %87, %86 : vector<8x32xf32>
    %89 = vector.extract_strided_slice %78 {offsets = [0, 64], sizes = [8, 32], strides = [1, 1]} : vector<8x128xf32> to vector<8x32xf32>
    %90 = vector.extract_strided_slice %78 {offsets = [0, 96], sizes = [8, 32], strides = [1, 1]} : vector<8x128xf32> to vector<8x32xf32>
    %cst_31 = arith.constant 1.000000e+00 : f32
    %91 = vector.broadcast %cst_31 : f32 to vector<8x32xf32>
    %92 = arith.addf %90, %91 : vector<8x32xf32>
    %cst_32 = arith.constant 5.000000e-01 : f32
    %93 = vector.broadcast %cst_32 : f32 to vector<8x32xf32>
    %94 = arith.mulf %93, %92 : vector<8x32xf32>
    %95 = arith.mulf %88, %70 : vector<8x32xf32>
    %96 = arith.mulf %83, %89 : vector<8x32xf32>
    %97 = arith.addf %95, %96 : vector<8x32xf32>
    %98 = math.tanh %97 : vector<8x32xf32>
    %99 = arith.mulf %94, %98 : vector<8x32xf32>
    %100 = vector.extract_strided_slice %6 {offsets = [24, 0], sizes = [8, 128], strides = [1, 1]} : vector<64x128xf32> to vector<8x128xf32>
    %cst_33 = arith.constant dense<0.000000e+00> : vector<8x128xf32>
    %101 = tpu.matmul %99, %7, %cst_33 {dimension_numbers = #tpu.dot_dimension_numbers<[1], [0], [0], [1], [0, 0, 1, 1], [], []>} : vector<8x32xf32>, vector<32x128xf32>, vector<8x128xf32> -> vector<8x128xf32>
    %102 = arith.addf %100, %101 : vector<8x128xf32>
    %103 = vector.broadcast %16 : vector<1x128xf32> to vector<8x128xf32>
    %104 = arith.mulf %102, %103 : vector<8x128xf32>
    %105 = math.tanh %104 : vector<8x128xf32>
    %106 = vector.extract_strided_slice %105 {offsets = [0, 0], sizes = [8, 32], strides = [1, 1]} : vector<8x128xf32> to vector<8x32xf32>
    %cst_34 = arith.constant 1.000000e+00 : f32
    %107 = vector.broadcast %cst_34 : f32 to vector<8x32xf32>
    %108 = arith.addf %106, %107 : vector<8x32xf32>
    %cst_35 = arith.constant 5.000000e-01 : f32
    %109 = vector.broadcast %cst_35 : f32 to vector<8x32xf32>
    %110 = arith.mulf %109, %108 : vector<8x32xf32>
    %111 = vector.extract_strided_slice %105 {offsets = [0, 32], sizes = [8, 32], strides = [1, 1]} : vector<8x128xf32> to vector<8x32xf32>
    %cst_36 = arith.constant 1.000000e+00 : f32
    %112 = vector.broadcast %cst_36 : f32 to vector<8x32xf32>
    %113 = arith.addf %111, %112 : vector<8x32xf32>
    %cst_37 = arith.constant 5.000000e-01 : f32
    %114 = vector.broadcast %cst_37 : f32 to vector<8x32xf32>
    %115 = arith.mulf %114, %113 : vector<8x32xf32>
    %116 = vector.extract_strided_slice %105 {offsets = [0, 64], sizes = [8, 32], strides = [1, 1]} : vector<8x128xf32> to vector<8x32xf32>
    %117 = vector.extract_strided_slice %105 {offsets = [0, 96], sizes = [8, 32], strides = [1, 1]} : vector<8x128xf32> to vector<8x32xf32>
    %cst_38 = arith.constant 1.000000e+00 : f32
    %118 = vector.broadcast %cst_38 : f32 to vector<8x32xf32>
    %119 = arith.addf %117, %118 : vector<8x32xf32>
    %cst_39 = arith.constant 5.000000e-01 : f32
    %120 = vector.broadcast %cst_39 : f32 to vector<8x32xf32>
    %121 = arith.mulf %120, %119 : vector<8x32xf32>
    %122 = arith.mulf %115, %97 : vector<8x32xf32>
    %123 = arith.mulf %110, %116 : vector<8x32xf32>
    %124 = arith.addf %122, %123 : vector<8x32xf32>
    %125 = math.tanh %124 : vector<8x32xf32>
    %126 = arith.mulf %121, %125 : vector<8x32xf32>
    %127 = vector.extract_strided_slice %6 {offsets = [32, 0], sizes = [8, 128], strides = [1, 1]} : vector<64x128xf32> to vector<8x128xf32>
    %cst_40 = arith.constant dense<0.000000e+00> : vector<8x128xf32>
    %128 = tpu.matmul %126, %7, %cst_40 {dimension_numbers = #tpu.dot_dimension_numbers<[1], [0], [0], [1], [0, 0, 1, 1], [], []>} : vector<8x32xf32>, vector<32x128xf32>, vector<8x128xf32> -> vector<8x128xf32>
    %129 = arith.addf %127, %128 : vector<8x128xf32>
    %130 = vector.broadcast %16 : vector<1x128xf32> to vector<8x128xf32>
    %131 = arith.mulf %129, %130 : vector<8x128xf32>
    %132 = math.tanh %131 : vector<8x128xf32>
    %133 = vector.extract_strided_slice %132 {offsets = [0, 0], sizes = [8, 32], strides = [1, 1]} : vector<8x128xf32> to vector<8x32xf32>
    %cst_41 = arith.constant 1.000000e+00 : f32
    %134 = vector.broadcast %cst_41 : f32 to vector<8x32xf32>
    %135 = arith.addf %133, %134 : vector<8x32xf32>
    %cst_42 = arith.constant 5.000000e-01 : f32
    %136 = vector.broadcast %cst_42 : f32 to vector<8x32xf32>
    %137 = arith.mulf %136, %135 : vector<8x32xf32>
    %138 = vector.extract_strided_slice %132 {offsets = [0, 32], sizes = [8, 32], strides = [1, 1]} : vector<8x128xf32> to vector<8x32xf32>
    %cst_43 = arith.constant 1.000000e+00 : f32
    %139 = vector.broadcast %cst_43 : f32 to vector<8x32xf32>
    %140 = arith.addf %138, %139 : vector<8x32xf32>
    %cst_44 = arith.constant 5.000000e-01 : f32
    %141 = vector.broadcast %cst_44 : f32 to vector<8x32xf32>
    %142 = arith.mulf %141, %140 : vector<8x32xf32>
    %143 = vector.extract_strided_slice %132 {offsets = [0, 64], sizes = [8, 32], strides = [1, 1]} : vector<8x128xf32> to vector<8x32xf32>
    %144 = vector.extract_strided_slice %132 {offsets = [0, 96], sizes = [8, 32], strides = [1, 1]} : vector<8x128xf32> to vector<8x32xf32>
    %cst_45 = arith.constant 1.000000e+00 : f32
    %145 = vector.broadcast %cst_45 : f32 to vector<8x32xf32>
    %146 = arith.addf %144, %145 : vector<8x32xf32>
    %cst_46 = arith.constant 5.000000e-01 : f32
    %147 = vector.broadcast %cst_46 : f32 to vector<8x32xf32>
    %148 = arith.mulf %147, %146 : vector<8x32xf32>
    %149 = arith.mulf %142, %124 : vector<8x32xf32>
    %150 = arith.mulf %137, %143 : vector<8x32xf32>
    %151 = arith.addf %149, %150 : vector<8x32xf32>
    %152 = math.tanh %151 : vector<8x32xf32>
    %153 = arith.mulf %148, %152 : vector<8x32xf32>
    %154 = vector.extract_strided_slice %6 {offsets = [40, 0], sizes = [8, 128], strides = [1, 1]} : vector<64x128xf32> to vector<8x128xf32>
    %cst_47 = arith.constant dense<0.000000e+00> : vector<8x128xf32>
    %155 = tpu.matmul %153, %7, %cst_47 {dimension_numbers = #tpu.dot_dimension_numbers<[1], [0], [0], [1], [0, 0, 1, 1], [], []>} : vector<8x32xf32>, vector<32x128xf32>, vector<8x128xf32> -> vector<8x128xf32>
    %156 = arith.addf %154, %155 : vector<8x128xf32>
    %157 = vector.broadcast %16 : vector<1x128xf32> to vector<8x128xf32>
    %158 = arith.mulf %156, %157 : vector<8x128xf32>
    %159 = math.tanh %158 : vector<8x128xf32>
    %160 = vector.extract_strided_slice %159 {offsets = [0, 0], sizes = [8, 32], strides = [1, 1]} : vector<8x128xf32> to vector<8x32xf32>
    %cst_48 = arith.constant 1.000000e+00 : f32
    %161 = vector.broadcast %cst_48 : f32 to vector<8x32xf32>
    %162 = arith.addf %160, %161 : vector<8x32xf32>
    %cst_49 = arith.constant 5.000000e-01 : f32
    %163 = vector.broadcast %cst_49 : f32 to vector<8x32xf32>
    %164 = arith.mulf %163, %162 : vector<8x32xf32>
    %165 = vector.extract_strided_slice %159 {offsets = [0, 32], sizes = [8, 32], strides = [1, 1]} : vector<8x128xf32> to vector<8x32xf32>
    %cst_50 = arith.constant 1.000000e+00 : f32
    %166 = vector.broadcast %cst_50 : f32 to vector<8x32xf32>
    %167 = arith.addf %165, %166 : vector<8x32xf32>
    %cst_51 = arith.constant 5.000000e-01 : f32
    %168 = vector.broadcast %cst_51 : f32 to vector<8x32xf32>
    %169 = arith.mulf %168, %167 : vector<8x32xf32>
    %170 = vector.extract_strided_slice %159 {offsets = [0, 64], sizes = [8, 32], strides = [1, 1]} : vector<8x128xf32> to vector<8x32xf32>
    %171 = vector.extract_strided_slice %159 {offsets = [0, 96], sizes = [8, 32], strides = [1, 1]} : vector<8x128xf32> to vector<8x32xf32>
    %cst_52 = arith.constant 1.000000e+00 : f32
    %172 = vector.broadcast %cst_52 : f32 to vector<8x32xf32>
    %173 = arith.addf %171, %172 : vector<8x32xf32>
    %cst_53 = arith.constant 5.000000e-01 : f32
    %174 = vector.broadcast %cst_53 : f32 to vector<8x32xf32>
    %175 = arith.mulf %174, %173 : vector<8x32xf32>
    %176 = arith.mulf %169, %151 : vector<8x32xf32>
    %177 = arith.mulf %164, %170 : vector<8x32xf32>
    %178 = arith.addf %176, %177 : vector<8x32xf32>
    %179 = math.tanh %178 : vector<8x32xf32>
    %180 = arith.mulf %175, %179 : vector<8x32xf32>
    %181 = vector.extract_strided_slice %6 {offsets = [48, 0], sizes = [8, 128], strides = [1, 1]} : vector<64x128xf32> to vector<8x128xf32>
    %cst_54 = arith.constant dense<0.000000e+00> : vector<8x128xf32>
    %182 = tpu.matmul %180, %7, %cst_54 {dimension_numbers = #tpu.dot_dimension_numbers<[1], [0], [0], [1], [0, 0, 1, 1], [], []>} : vector<8x32xf32>, vector<32x128xf32>, vector<8x128xf32> -> vector<8x128xf32>
    %183 = arith.addf %181, %182 : vector<8x128xf32>
    %184 = vector.broadcast %16 : vector<1x128xf32> to vector<8x128xf32>
    %185 = arith.mulf %183, %184 : vector<8x128xf32>
    %186 = math.tanh %185 : vector<8x128xf32>
    %187 = vector.extract_strided_slice %186 {offsets = [0, 0], sizes = [8, 32], strides = [1, 1]} : vector<8x128xf32> to vector<8x32xf32>
    %cst_55 = arith.constant 1.000000e+00 : f32
    %188 = vector.broadcast %cst_55 : f32 to vector<8x32xf32>
    %189 = arith.addf %187, %188 : vector<8x32xf32>
    %cst_56 = arith.constant 5.000000e-01 : f32
    %190 = vector.broadcast %cst_56 : f32 to vector<8x32xf32>
    %191 = arith.mulf %190, %189 : vector<8x32xf32>
    %192 = vector.extract_strided_slice %186 {offsets = [0, 32], sizes = [8, 32], strides = [1, 1]} : vector<8x128xf32> to vector<8x32xf32>
    %cst_57 = arith.constant 1.000000e+00 : f32
    %193 = vector.broadcast %cst_57 : f32 to vector<8x32xf32>
    %194 = arith.addf %192, %193 : vector<8x32xf32>
    %cst_58 = arith.constant 5.000000e-01 : f32
    %195 = vector.broadcast %cst_58 : f32 to vector<8x32xf32>
    %196 = arith.mulf %195, %194 : vector<8x32xf32>
    %197 = vector.extract_strided_slice %186 {offsets = [0, 64], sizes = [8, 32], strides = [1, 1]} : vector<8x128xf32> to vector<8x32xf32>
    %198 = vector.extract_strided_slice %186 {offsets = [0, 96], sizes = [8, 32], strides = [1, 1]} : vector<8x128xf32> to vector<8x32xf32>
    %cst_59 = arith.constant 1.000000e+00 : f32
    %199 = vector.broadcast %cst_59 : f32 to vector<8x32xf32>
    %200 = arith.addf %198, %199 : vector<8x32xf32>
    %cst_60 = arith.constant 5.000000e-01 : f32
    %201 = vector.broadcast %cst_60 : f32 to vector<8x32xf32>
    %202 = arith.mulf %201, %200 : vector<8x32xf32>
    %203 = arith.mulf %196, %178 : vector<8x32xf32>
    %204 = arith.mulf %191, %197 : vector<8x32xf32>
    %205 = arith.addf %203, %204 : vector<8x32xf32>
    %206 = math.tanh %205 : vector<8x32xf32>
    %207 = arith.mulf %202, %206 : vector<8x32xf32>
    %208 = vector.extract_strided_slice %6 {offsets = [56, 0], sizes = [8, 128], strides = [1, 1]} : vector<64x128xf32> to vector<8x128xf32>
    %cst_61 = arith.constant dense<0.000000e+00> : vector<8x128xf32>
    %209 = tpu.matmul %207, %7, %cst_61 {dimension_numbers = #tpu.dot_dimension_numbers<[1], [0], [0], [1], [0, 0, 1, 1], [], []>} : vector<8x32xf32>, vector<32x128xf32>, vector<8x128xf32> -> vector<8x128xf32>
    %210 = arith.addf %208, %209 : vector<8x128xf32>
    %211 = vector.broadcast %16 : vector<1x128xf32> to vector<8x128xf32>
    %212 = arith.mulf %210, %211 : vector<8x128xf32>
    %213 = math.tanh %212 : vector<8x128xf32>
    %214 = vector.extract_strided_slice %213 {offsets = [0, 0], sizes = [8, 32], strides = [1, 1]} : vector<8x128xf32> to vector<8x32xf32>
    %cst_62 = arith.constant 1.000000e+00 : f32
    %215 = vector.broadcast %cst_62 : f32 to vector<8x32xf32>
    %216 = arith.addf %214, %215 : vector<8x32xf32>
    %cst_63 = arith.constant 5.000000e-01 : f32
    %217 = vector.broadcast %cst_63 : f32 to vector<8x32xf32>
    %218 = arith.mulf %217, %216 : vector<8x32xf32>
    %219 = vector.extract_strided_slice %213 {offsets = [0, 32], sizes = [8, 32], strides = [1, 1]} : vector<8x128xf32> to vector<8x32xf32>
    %cst_64 = arith.constant 1.000000e+00 : f32
    %220 = vector.broadcast %cst_64 : f32 to vector<8x32xf32>
    %221 = arith.addf %219, %220 : vector<8x32xf32>
    %cst_65 = arith.constant 5.000000e-01 : f32
    %222 = vector.broadcast %cst_65 : f32 to vector<8x32xf32>
    %223 = arith.mulf %222, %221 : vector<8x32xf32>
    %224 = vector.extract_strided_slice %213 {offsets = [0, 64], sizes = [8, 32], strides = [1, 1]} : vector<8x128xf32> to vector<8x32xf32>
    %225 = vector.extract_strided_slice %213 {offsets = [0, 96], sizes = [8, 32], strides = [1, 1]} : vector<8x128xf32> to vector<8x32xf32>
    %cst_66 = arith.constant 1.000000e+00 : f32
    %226 = vector.broadcast %cst_66 : f32 to vector<8x32xf32>
    %227 = arith.addf %225, %226 : vector<8x32xf32>
    %cst_67 = arith.constant 5.000000e-01 : f32
    %228 = vector.broadcast %cst_67 : f32 to vector<8x32xf32>
    %229 = arith.mulf %228, %227 : vector<8x32xf32>
    %230 = arith.mulf %223, %205 : vector<8x32xf32>
    %231 = arith.mulf %218, %224 : vector<8x32xf32>
    %232 = arith.addf %230, %231 : vector<8x32xf32>
    %233 = math.tanh %232 : vector<8x32xf32>
    %234 = arith.mulf %229, %233 : vector<8x32xf32>
    %235 = tpu.concatenate %45, %72, %99, %126, %153, %180, %207, %234 in 1 : vector<8x32xf32>, vector<8x32xf32>, vector<8x32xf32>, vector<8x32xf32>, vector<8x32xf32>, vector<8x32xf32>, vector<8x32xf32>, vector<8x32xf32> -> vector<8x256xf32>
    %c0_68 = arith.constant 0 : index
    %c0_69 = arith.constant 0 : index
    %236 = vector.load %arg5[%c0_68, %c0_69] : memref<256x64xf32, #tpu.memory_space<vmem>>, vector<256x64xf32>
    %cst_70 = arith.constant dense<0.000000e+00> : vector<8x64xf32>
    %237 = tpu.matmul %235, %236, %cst_70 {dimension_numbers = #tpu.dot_dimension_numbers<[1], [0], [0], [1], [0, 0, 1, 1], [], []>} : vector<8x256xf32>, vector<256x64xf32>, vector<8x64xf32> -> vector<8x64xf32>
    %c0_71 = arith.constant 0 : index
    %c0_72 = arith.constant 0 : index
    %238 = vector.load %arg6[%c0_71, %c0_72] : memref<1x64xf32, #tpu.memory_space<vmem>>, vector<1x64xf32>
    %239 = vector.broadcast %238 : vector<1x64xf32> to vector<8x64xf32>
    %240 = arith.addf %237, %239 : vector<8x64xf32>
    %cst_73 = arith.constant 0.000000e+00 : f32
    %241 = vector.broadcast %cst_73 : f32 to vector<8x64xf32>
    %242 = arith.maximumf %240, %241 : vector<8x64xf32>
    %c0_74 = arith.constant 0 : index
    %c0_75 = arith.constant 0 : index
    %243 = vector.load %arg7[%c0_74, %c0_75] : memref<64x128xf32, #tpu.memory_space<vmem>>, vector<64x128xf32>
    %cst_76 = arith.constant dense<0.000000e+00> : vector<8x128xf32>
    %244 = tpu.matmul %242, %243, %cst_76 {dimension_numbers = #tpu.dot_dimension_numbers<[1], [0], [0], [1], [0, 0, 1, 1], [], []>} : vector<8x64xf32>, vector<64x128xf32>, vector<8x128xf32> -> vector<8x128xf32>
    %c0_77 = arith.constant 0 : index
    %c0_78 = arith.constant 0 : index
    %245 = vector.load %arg8[%c0_77, %c0_78] : memref<1x128xf32, #tpu.memory_space<vmem>>, vector<1x128xf32>
    %246 = vector.broadcast %245 : vector<1x128xf32> to vector<8x128xf32>
    %247 = arith.addf %244, %246 : vector<8x128xf32>
    %c0_79 = arith.constant 0 : index
    %c0_80 = arith.constant 0 : index
    %248 = vector.load %arg9[%c0_79, %c0_80] : memref<8x128xf32, #tpu.memory_space<vmem>>, vector<8x128xf32>
    tpu.vector_store %arg9[%c0_79, %c0_80], %247 {strides = array<i32>} : memref<8x128xf32, #tpu.memory_space<vmem>>, vector<8x128xf32>,
    return
  }
  func.func @transform_0(%arg0: i32) -> (i32, i32, i32) {
    %c0_i32 = arith.constant 0 : i32
    %c0_i32_0 = arith.constant 0 : i32
    %c0_i32_1 = arith.constant 0 : i32
    return %c0_i32, %arg0, %c0_i32_0 : i32, i32, i32
  }
  func.func @transform_1(%arg0: i32) -> (i32, i32) {
    %c0_i32 = arith.constant 0 : i32
    %c0_i32_0 = arith.constant 0 : i32
    %c0_i32_1 = arith.constant 0 : i32
    return %c0_i32, %c0_i32_0 : i32, i32
  }
  func.func @transform_2(%arg0: i32) -> (i32, i32) {
    %c0_i32 = arith.constant 0 : i32
    %c0_i32_0 = arith.constant 0 : i32
    %c0_i32_1 = arith.constant 0 : i32
    return %c0_i32, %c0_i32_0 : i32, i32
  }
  func.func @transform_3(%arg0: i32) -> (i32, i32) {
    %c0_i32 = arith.constant 0 : i32
    %c0_i32_0 = arith.constant 0 : i32
    %c0_i32_1 = arith.constant 0 : i32
    return %c0_i32, %c0_i32_0 : i32, i32
  }
  func.func @transform_4(%arg0: i32) -> (i32, i32) {
    %c0_i32 = arith.constant 0 : i32
    %c0_i32_0 = arith.constant 0 : i32
    %c0_i32_1 = arith.constant 0 : i32
    return %c0_i32, %c0_i32_0 : i32, i32
  }
  func.func @transform_5(%arg0: i32) -> (i32, i32) {
    %c0_i32 = arith.constant 0 : i32
    %c0_i32_0 = arith.constant 0 : i32
    %c0_i32_1 = arith.constant 0 : i32
    return %c0_i32, %c0_i32_0 : i32, i32
  }
  func.func @transform_6(%arg0: i32) -> (i32, i32) {
    %c0_i32 = arith.constant 0 : i32
    %c0_i32_0 = arith.constant 0 : i32
    %c0_i32_1 = arith.constant 0 : i32
    return %c0_i32, %c0_i32_0 : i32, i32
  }
  func.func @transform_7(%arg0: i32) -> (i32, i32) {
    %c0_i32 = arith.constant 0 : i32
    %c0_i32_0 = arith.constant 0 : i32
    %c0_i32_1 = arith.constant 0 : i32
    return %c0_i32, %c0_i32_0 : i32, i32
  }
  func.func @transform_8(%arg0: i32) -> (i32, i32) {
    %c0_i32 = arith.constant 0 : i32
    %c0_i32_0 = arith.constant 0 : i32
    return %arg0, %c0_i32 : i32, i32
  }
}

</mosaic_0001>

<llo_original>
// kernel: build_ca1_forward.1
$region0: #{build_ca1_forward.1}
  #allocation0 [shape = 'u32[]', space=smem, size = 0x4, offset = 0x4, fixed_abs, tag = 'smem constant byte address 0x4 - core index']
  #allocation1 [shape = 'u32[144,128]{1,0:T(1,128)}', space=vmem, size = 0x12000, scoped, tag = 'internal scratch']
  %s0 = inlined_call_operand.vmem [shape: f32[8,8,16], index: 0, kind: input, shape index: {}]
  %s1 = inlined_call_operand.vmem [shape: f32[16,128], index: 1, kind: input, shape index: {}]
  %s2 = inlined_call_operand.vmem [shape: f32[32,128], index: 2, kind: input, shape index: {}]
  %s3 = inlined_call_operand.vmem [shape: f32[1,128], index: 3, kind: input, shape index: {}]
  %s4 = inlined_call_operand.vmem [shape: f32[256,64], index: 4, kind: input, shape index: {}]
  %s5 = inlined_call_operand.vmem [shape: f32[1,64], index: 5, kind: input, shape index: {}]
  %s6 = inlined_call_operand.vmem [shape: f32[64,128], index: 6, kind: input, shape index: {}]
  %s7 = inlined_call_operand.vmem [shape: f32[1,128], index: 7, kind: input, shape index: {}]
  %s8 = inlined_call_operand.vmem [shape: f32[8,128], index: 8, kind: output, shape index: {}]
  %s9 = sld [smem:[#allocation0]]
  $region42: #{build_ca1_forward.1} parent=0
    _
  %s11 = ssub.s32 1, %s9
  %s12 = scalar_select 0, %s11, %s9
  // Predicated region
  $region2: #{build_ca1_forward.1} parent=0 // pred_check
    _
  $region3: #{build_ca1_forward.1} parent=0 // pred_check_branch
    %14 = sbr.rel (0) target = $region5
  $region4: #{build_ca1_forward.1} parent=0 // pred_region
    _
  $region5: #{build_ca1_forward.1} parent=0 // pred_fallthru
    _
  // Predicated region
  $region6: #{build_ca1_forward.1} parent=0 // pred_check
    _
  $region7: #{build_ca1_forward.1} parent=0 // pred_check_branch
    %16 = sbr.rel (0) target = $region9
  $region8: #{build_ca1_forward.1} parent=0 // pred_region
    _
  $region9: #{build_ca1_forward.1} parent=0 // pred_fallthru
    _
  // Predicated region
  $region10: #{build_ca1_forward.1} parent=0 // pred_check
    _
  $region11: #{build_ca1_forward.1} parent=0 // pred_check_branch
    %18 = sbr.rel (0) target = $region13
  $region12: #{build_ca1_forward.1} parent=0 // pred_region
    _
  $region13: #{build_ca1_forward.1} parent=0 // pred_fallthru
    _
  // Predicated region
  $region14: #{build_ca1_forward.1} parent=0 // pred_check
    _
  $region15: #{build_ca1_forward.1} parent=0 // pred_check_branch
    %20 = sbr.rel (0) target = $region17
  $region16: #{build_ca1_forward.1} parent=0 // pred_region
    _
  $region17: #{build_ca1_forward.1} parent=0 // pred_fallthru
    _
  // Predicated region
  $region18: #{build_ca1_forward.1} parent=0 // pred_check
    _
  $region19: #{build_ca1_forward.1} parent=0 // pred_check_branch
    %22 = sbr.rel (0) target = $region21
  $region20: #{build_ca1_forward.1} parent=0 // pred_region
    _
  $region21: #{build_ca1_forward.1} parent=0 // pred_fallthru
    _
  // Predicated region
  $region22: #{build_ca1_forward.1} parent=0 // pred_check
    _
  $region23: #{build_ca1_forward.1} parent=0 // pred_check_branch
    %24 = sbr.rel (0) target = $region25
  $region24: #{build_ca1_forward.1} parent=0 // pred_region
    _
  $region25: #{build_ca1_forward.1} parent=0 // pred_fallthru
    _
  // Predicated region
  $region26: #{build_ca1_forward.1} parent=0 // pred_check
    _
  $region27: #{build_ca1_forward.1} parent=0 // pred_check_branch
    %26 = sbr.rel (0) target = $region29
  $region28: #{build_ca1_forward.1} parent=0 // pred_region
    _
  $region29: #{build_ca1_forward.1} parent=0 // pred_fallthru
    _
  // Predicated region
  $region30: #{build_ca1_forward.1} parent=0 // pred_check
    _
  $region31: #{build_ca1_forward.1} parent=0 // pred_check_branch
    %28 = sbr.rel (0) target = $region33
  $region32: #{build_ca1_forward.1} parent=0 // pred_region
    _
  $region33: #{build_ca1_forward.1} parent=0 // pred_fallthru
    _
  %v29 = vld [vmem:[%s0] sm:$0xff]
  %v30 = vld [vmem:[%s0 + $0x8] sm:$0xff]
  %v31 = vld [vmem:[%s0 + $0x10] sm:$0xff]
  %v32 = vld [vmem:[%s0 + $0x18] sm:$0xff]
  %v33 = vld [vmem:[%s0 + $0x20] sm:$0xff]
  %v34 = vld [vmem:[%s0 + $0x28] sm:$0xff]
  %v35 = vld [vmem:[%s0 + $0x30] sm:$0xff]
  %v36 = vld [vmem:[%s0 + $0x38] sm:$0xff]
  %v37 = vld [vmem:[%s1] sm:$0xff]
  %v38 = vld [vmem:[%s1 + $0x8] sm:$0xff]
  %v39 = vld [vmem:[%s3] sm:$0x1]
  %v41 = vlaneseq
  %v42 = vshrl.u32 %v41, 7
  %v43 = vsub.s32 0, %v42
  %v44 = vrot.slane %v39, %v43
  %vm46 = vcmask 130048
  %v48 = vsel %vm46, %v29, 0
  %v51 = vsel %vm46, %v30, 0
  %v54 = vsel %vm46, %v31, 0
  %v57 = vsel %vm46, %v32, 0
  %v60 = vsel %vm46, %v33, 0
  %v63 = vsel %vm46, %v34, 0
  %v66 = vsel %vm46, %v35, 0
  %v69 = vsel %vm46, %v36, 0
  %71 = vmatprep.subr.mxu0 0.0
  %72 = vmatpush1.msra.mxu0 %v37
  %73 = vmatprep.subr.mxu0 0.0
  %74 = vmatpush1.msra.mxu0 %v38
  %75 = vmatprep.subr.mxu0 0.0
  %76 = vmatpush1.msra.mxu0 0.0
  %77 = vmatprep.subr.mxu0 0.0
  %78 = vmatpush1.msra.mxu0 0.0
  %79 = vmatprep.subr.mxu0 0.0
  %80 = vmatpush1.msra.mxu0 0.0
  %81 = vmatprep.subr.mxu0 0.0
  %82 = vmatpush1.msra.mxu0 0.0
  %83 = vmatprep.subr.mxu0 0.0
  %84 = vmatpush1.msra.mxu0 0.0
  %85 = vmatprep.subr.mxu0 0.0
  %86 = vmatpush1.msra.mxu0 0.0
  %87 = vmatprep.subr.mxu0 0.0
  %88 = vmatpush1.msra.mxu0 0.0
  %89 = vmatprep.subr.mxu0 0.0
  %90 = vmatpush1.msra.mxu0 0.0
  %91 = vmatprep.subr.mxu0 0.0
  %92 = vmatpush1.msra.mxu0 0.0
  %93 = vmatprep.subr.mxu0 0.0
  %94 = vmatpush1.msra.mxu0 0.0
  %95 = vmatprep.subr.mxu0 0.0
  %96 = vmatpush1.msra.mxu0 0.0
  %97 = vmatprep.subr.mxu0 0.0
  %98 = vmatpush1.msra.mxu0 0.0
  %99 = vmatprep.subr.mxu0 0.0
  %100 = vmatpush1.msra.mxu0 0.0
  %101 = vmatprep.subr.mxu0 0.0
  %102 = vmatpush1.msra.mxu0 0.0
  %103 = vmatprep.subr.mxu0 0.0
  %104 = vmatpush1.msra.mxu0 0.0
  %105 = vmatprep.subr.mxu0 0.0
  %106 = vmatpush1.msra.mxu0 0.0
  %107 = vmatprep.subr.mxu0 0.0
  %108 = vmatpush1.msra.mxu0 0.0
  %109 = vmatprep.subr.mxu0 0.0
  %110 = vmatpush1.msra.mxu0 0.0
  %111 = vmatprep.subr.mxu0 0.0
  %112 = vmatpush1.msra.mxu0 0.0
  %113 = vmatprep.subr.mxu0 0.0
  %114 = vmatpush1.msra.mxu0 0.0
  %115 = vmatprep.subr.mxu0 0.0
  %116 = vmatpush1.msra.mxu0 0.0
  %117 = vmatprep.subr.mxu0 0.0
  %118 = vmatpush1.msra.mxu0 0.0
  %119 = vmatprep.subr.mxu0 0.0
  %120 = vmatpush1.msra.mxu0 0.0
  %121 = vmatprep.subr.mxu0 0.0
  %122 = vmatpush1.msra.mxu0 0.0
  %123 = vmatprep.subr.mxu0 0.0
  %124 = vmatpush1.msra.mxu0 0.0
  %125 = vmatprep.subr.mxu0 0.0
  %126 = vmatpush1.msra.mxu0 0.0
  %127 = vmatprep.subr.mxu0 0.0
  %128 = vmatpush1.msra.mxu0 0.0
  %129 = vmatprep.subr.mxu0 0.0
  %130 = vmatpush1.msra.mxu0 0.0
  %131 = vmatprep.subr.mxu0 0.0
  %132 = vmatpush1.msra.mxu0 0.0
  %133 = vmatprep.subr.mxu0 0.0
  %134 = vmatpush1.msra.mxu0 0.0
  %135 = vmatprep.mubr.f32.mxu0 0.0
  %136 = vmatmul.mubr.f32.gmra.mrb[0].mxu0 %v48
  %v137 = vpop.f32.mrb[0].mxu0
  %v138 = vadd.f32 %v44, %v137
  %v139 = vpop.f32.mrb[0].mxu0
  %140 = vmatprep.mubr.f32.mxu0 0.0
  %141 = vmatmul.mubr.f32.gmra.mrb[0].mxu0 %v51
  %v142 = vpop.f32.mrb[0].mxu0
  %v143 = vadd.f32 %v44, %v142
  %v144 = vpop.f32.mrb[0].mxu0
  %145 = vmatprep.mubr.f32.mxu0 0.0
  %146 = vmatmul.mubr.f32.gmra.mrb[0].mxu0 %v54
  %v147 = vpop.f32.mrb[0].mxu0
  %v148 = vadd.f32 %v44, %v147
  %v149 = vpop.f32.mrb[0].mxu0
  %150 = vmatprep.mubr.f32.mxu0 0.0
  %151 = vmatmul.mubr.f32.gmra.mrb[0].mxu0 %v57
  %v152 = vpop.f32.mrb[0].mxu0
  %v153 = vadd.f32 %v44, %v152
  %v154 = vpop.f32.mrb[0].mxu0
  %155 = vmatprep.mubr.f32.mxu0 0.0
  %156 = vmatmul.mubr.f32.gmra.mrb[0].mxu0 %v60
  %v157 = vpop.f32.mrb[0].mxu0
  %v158 = vadd.f32 %v44, %v157
  %v159 = vpop.f32.mrb[0].mxu0
  %160 = vmatprep.mubr.f32.mxu0 0.0
  %161 = vmatmul.mubr.f32.gmra.mrb[0].mxu0 %v63
  %v162 = vpop.f32.mrb[0].mxu0
  %v163 = vadd.f32 %v44, %v162
  %v164 = vpop.f32.mrb[0].mxu0
  %165 = vmatprep.mubr.f32.mxu0 0.0
  %166 = vmatmul.mubr.f32.gmra.mrb[0].mxu0 %v66
  %v167 = vpop.f32.mrb[0].mxu0
  %v168 = vadd.f32 %v44, %v167
  %v169 = vpop.f32.mrb[0].mxu0
  %170 = vmatprep.mubr.f32.mxu0 0.0
  %171 = vmatmul.mubr.f32.gmra.mrb[0].mxu0 %v69
  %v172 = vpop.f32.mrb[0].mxu0
  %v173 = vadd.f32 %v44, %v172
  %v174 = vpop.f32.mrb[0].mxu0
  %175 = vdwg.mxu0
  %v176 = vld [vmem:[%s2] sm:$0xff]
  %v177 = vld [vmem:[%s2 + $0x8] sm:$0xff]
  %v178 = vld [vmem:[%s2 + $0x10] sm:$0xff]
  %v179 = vld [vmem:[%s2 + $0x18] sm:$0xff]
  %v180 = vlaneseq
  %v181 = vand.u32 %v180, 127
  %vm182 = vcmp.ge.s32.totalorder %v181, 64
  %vm183 = vcmp.lt.s32.totalorder %v181, 96
  %vm184 = vmand %vm182, %vm183
  %v185 = vsel %vm184, 1.0, 0.5
  %vm186 = vcmask 261120
  %v188 = vsel %vm186, 0.0, 0
  %190 = vmatprep.subr.mxu0 0.0
  %191 = vmatpush1.msra.mxu0 %v176
  %192 = vmatprep.subr.mxu0 0.0
  %193 = vmatpush1.msra.mxu0 %v177
  %194 = vmatprep.subr.mxu0 0.0
  %195 = vmatpush1.msra.mxu0 %v178
  %196 = vmatprep.subr.mxu0 0.0
  %197 = vmatpush1.msra.mxu0 %v179
  %198 = vmatprep.subr.mxu0 0.0
  %199 = vmatpush1.msra.mxu0 0.0
  %200 = vmatprep.subr.mxu0 0.0
  %201 = vmatpush1.msra.mxu0 0.0
  %202 = vmatprep.subr.mxu0 0.0
  %203 = vmatpush1.msra.mxu0 0.0
  %204 = vmatprep.subr.mxu0 0.0
  %205 = vmatpush1.msra.mxu0 0.0
  %206 = vmatprep.subr.mxu0 0.0
  %207 = vmatpush1.msra.mxu0 0.0
  %208 = vmatprep.subr.mxu0 0.0
  %209 = vmatpush1.msra.mxu0 0.0
  %210 = vmatprep.subr.mxu0 0.0
  %211 = vmatpush1.msra.mxu0 0.0
  %212 = vmatprep.subr.mxu0 0.0
  %213 = vmatpush1.msra.mxu0 0.0
  %214 = vmatprep.subr.mxu0 0.0
  %215 = vmatpush1.msra.mxu0 0.0
  %216 = vmatprep.subr.mxu0 0.0
  %217 = vmatpush1.msra.mxu0 0.0
  %218 = vmatprep.subr.mxu0 0.0
  %219 = vmatpush1.msra.mxu0 0.0
  %220 = vmatprep.subr.mxu0 0.0
  %221 = vmatpush1.msra.mxu0 0.0
  %222 = vmatprep.subr.mxu0 0.0
  %223 = vmatpush1.msra.mxu0 0.0
  %224 = vmatprep.subr.mxu0 0.0
  %225 = vmatpush1.msra.mxu0 0.0
  %226 = vmatprep.subr.mxu0 0.0
  %227 = vmatpush1.msra.mxu0 0.0
  %228 = vmatprep.subr.mxu0 0.0
  %229 = vmatpush1.msra.mxu0 0.0
  %230 = vmatprep.subr.mxu0 0.0
  %231 = vmatpush1.msra.mxu0 0.0
  %232 = vmatprep.subr.mxu0 0.0
  %233 = vmatpush1.msra.mxu0 0.0
  %234 = vmatprep.subr.mxu0 0.0
  %235 = vmatpush1.msra.mxu0 0.0
  %236 = vmatprep.subr.mxu0 0.0
  %237 = vmatpush1.msra.mxu0 0.0
  %238 = vmatprep.subr.mxu0 0.0
  %239 = vmatpush1.msra.mxu0 0.0
  %240 = vmatprep.subr.mxu0 0.0
  %241 = vmatpush1.msra.mxu0 0.0
  %242 = vmatprep.subr.mxu0 0.0
  %243 = vmatpush1.msra.mxu0 0.0
  %244 = vmatprep.subr.mxu0 0.0
  %245 = vmatpush1.msra.mxu0 0.0
  %246 = vmatprep.subr.mxu0 0.0
  %247 = vmatpush1.msra.mxu0 0.0
  %248 = vmatprep.subr.mxu0 0.0
  %249 = vmatpush1.msra.mxu0 0.0
  %250 = vmatprep.subr.mxu0 0.0
  %251 = vmatpush1.msra.mxu0 0.0
  %252 = vmatprep.subr.mxu0 0.0
  %253 = vmatpush1.msra.mxu0 0.0
  %254 = vmatprep.mubr.f32.mxu0 0.0
  %255 = vmatmul.mubr.f32.gmra.mrb[0].mxu0 %v188
  %v256 = vpop.f32.mrb[0].mxu0
  %v257 = vadd.f32 0.0, %v256
  %v258 = vpop.f32.mrb[0].mxu0
  %259 = vdwg.mxu0
  %v260 = vadd.f32 %v138, %v257
  %v261 = vmul.f32 %v260, %v185
  %v262 = vtanh.pop %v261
  %v263 = vadd.f32 %v262, 1.0
  %v264 = vmul.f32 %v263, 0.5
  %v265 = vmul.f32 %v264, 0.0
  %267 = vrot.lane.b32.xlu0 %v262, 64
  %v268 = vpop.permute.xlu0 %267
  %v270 = vmul.f32 %v264, %v268
  %272 = vrot.lane.b32.xlu0 %v270, 32
  %v273 = vpop.permute.xlu0 %272
  %v275 = vadd.f32 %v265, %v273
  %v276 = vtanh.pop %v275
  %278 = vrot.lane.b32.xlu0 %v276, 64
  %v279 = vpop.permute.xlu0 %278
  %v281 = vmul.f32 %v264, %v279
  %283 = vrot.lane.b32.xlu0 %v281, 32
  %v284 = vpop.permute.xlu0 %283
  %v285 = vsel %vm186, %v284, 0
  %287 = vmatprep.subr.mxu0 0.0
  %288 = vmatpush1.msra.mxu0 %v176
  %289 = vmatprep.subr.mxu0 0.0
  %290 = vmatpush1.msra.mxu0 %v177
  %291 = vmatprep.subr.mxu0 0.0
  %292 = vmatpush1.msra.mxu0 %v178
  %293 = vmatprep.subr.mxu0 0.0
  %294 = vmatpush1.msra.mxu0 %v179
  %295 = vmatprep.subr.mxu0 0.0
  %296 = vmatpush1.msra.mxu0 0.0
  %297 = vmatprep.subr.mxu0 0.0
  %298 = vmatpush1.msra.mxu0 0.0
  %299 = vmatprep.subr.mxu0 0.0
  %300 = vmatpush1.msra.mxu0 0.0
  %301 = vmatprep.subr.mxu0 0.0
  %302 = vmatpush1.msra.mxu0 0.0
  %303 = vmatprep.subr.mxu0 0.0
  %304 = vmatpush1.msra.mxu0 0.0
  %305 = vmatprep.subr.mxu0 0.0
  %306 = vmatpush1.msra.mxu0 0.0
  %307 = vmatprep.subr.mxu0 0.0
  %308 = vmatpush1.msra.mxu0 0.0
  %309 = vmatprep.subr.mxu0 0.0
  %310 = vmatpush1.msra.mxu0 0.0
  %311 = vmatprep.subr.mxu0 0.0
  %312 = vmatpush1.msra.mxu0 0.0
  %313 = vmatprep.subr.mxu0 0.0
  %314 = vmatpush1.msra.mxu0 0.0
  %315 = vmatprep.subr.mxu0 0.0
  %316 = vmatpush1.msra.mxu0 0.0
  %317 = vmatprep.subr.mxu0 0.0
  %318 = vmatpush1.msra.mxu0 0.0
  %319 = vmatprep.subr.mxu0 0.0
  %320 = vmatpush1.msra.mxu0 0.0
  %321 = vmatprep.subr.mxu0 0.0
  %322 = vmatpush1.msra.mxu0 0.0
  %323 = vmatprep.subr.mxu0 0.0
  %324 = vmatpush1.msra.mxu0 0.0
  %325 = vmatprep.subr.mxu0 0.0
  %326 = vmatpush1.msra.mxu0 0.0
  %327 = vmatprep.subr.mxu0 0.0
  %328 = vmatpush1.msra.mxu0 0.0
  %329 = vmatprep.subr.mxu0 0.0
  %330 = vmatpush1.msra.mxu0 0.0
  %331 = vmatprep.subr.mxu0 0.0
  %332 = vmatpush1.msra.mxu0 0.0
  %333 = vmatprep.subr.mxu0 0.0
  %334 = vmatpush1.msra.mxu0 0.0
  %335 = vmatprep.subr.mxu0 0.0
  %336 = vmatpush1.msra.mxu0 0.0
  %337 = vmatprep.subr.mxu0 0.0
  %338 = vmatpush1.msra.mxu0 0.0
  %339 = vmatprep.subr.mxu0 0.0
  %340 = vmatpush1.msra.mxu0 0.0
  %341 = vmatprep.subr.mxu0 0.0
  %342 = vmatpush1.msra.mxu0 0.0
  %343 = vmatprep.subr.mxu0 0.0
  %344 = vmatpush1.msra.mxu0 0.0
  %345 = vmatprep.subr.mxu0 0.0
  %346 = vmatpush1.msra.mxu0 0.0
  %347 = vmatprep.subr.mxu0 0.0
  %348 = vmatpush1.msra.mxu0 0.0
  %349 = vmatprep.subr.mxu0 0.0
  %350 = vmatpush1.msra.mxu0 0.0
  %351 = vmatprep.mubr.f32.mxu0 0.0
  %352 = vmatmul.mubr.f32.gmra.mrb[0].mxu0 %v285
  %v353 = vpop.f32.mrb[0].mxu0
  %v354 = vadd.f32 0.0, %v353
  %v355 = vpop.f32.mrb[0].mxu0
  %356 = vdwg.mxu0
  %v357 = vadd.f32 %v143, %v354
  %v358 = vmul.f32 %v357, %v185
  %v359 = vtanh.pop %v358
  %v360 = vadd.f32 %v359, 1.0
  %v361 = vmul.f32 %v360, 0.5
  %v362 = vmul.f32 %v361, %v275
  %364 = vrot.lane.b32.xlu0 %v359, 64
  %v365 = vpop.permute.xlu0 %364
  %v367 = vmul.f32 %v361, %v365
  %369 = vrot.lane.b32.xlu0 %v367, 32
  %v370 = vpop.permute.xlu0 %369
  %v372 = vadd.f32 %v362, %v370
  %v373 = vtanh.pop %v372
  %375 = vrot.lane.b32.xlu0 %v373, 64
  %v376 = vpop.permute.xlu0 %375
  %v378 = vmul.f32 %v361, %v376
  %380 = vrot.lane.b32.xlu0 %v378, 32
  %v381 = vpop.permute.xlu0 %380
  %v382 = vsel %vm186, %v381, 0
  %384 = vmatprep.subr.mxu0 0.0
  %385 = vmatpush1.msra.mxu0 %v176
  %386 = vmatprep.subr.mxu0 0.0
  %387 = vmatpush1.msra.mxu0 %v177
  %388 = vmatprep.subr.mxu0 0.0
  %389 = vmatpush1.msra.mxu0 %v178
  %390 = vmatprep.subr.mxu0 0.0
  %391 = vmatpush1.msra.mxu0 %v179
  %392 = vmatprep.subr.mxu0 0.0
  %393 = vmatpush1.msra.mxu0 0.0
  %394 = vmatprep.subr.mxu0 0.0
  %395 = vmatpush1.msra.mxu0 0.0
  %396 = vmatprep.subr.mxu0 0.0
  %397 = vmatpush1.msra.mxu0 0.0
  %398 = vmatprep.subr.mxu0 0.0
  %399 = vmatpush1.msra.mxu0 0.0
  %400 = vmatprep.subr.mxu0 0.0
  %401 = vmatpush1.msra.mxu0 0.0
  %402 = vmatprep.subr.mxu0 0.0
  %403 = vmatpush1.msra.mxu0 0.0
  %404 = vmatprep.subr.mxu0 0.0
  %405 = vmatpush1.msra.mxu0 0.0
  %406 = vmatprep.subr.mxu0 0.0
  %407 = vmatpush1.msra.mxu0 0.0
  %408 = vmatprep.subr.mxu0 0.0
  %409 = vmatpush1.msra.mxu0 0.0
  %410 = vmatprep.subr.mxu0 0.0
  %411 = vmatpush1.msra.mxu0 0.0
  %412 = vmatprep.subr.mxu0 0.0
  %413 = vmatpush1.msra.mxu0 0.0
  %414 = vmatprep.subr.mxu0 0.0
  %415 = vmatpush1.msra.mxu0 0.0
  %416 = vmatprep.subr.mxu0 0.0
  %417 = vmatpush1.msra.mxu0 0.0
  %418 = vmatprep.subr.mxu0 0.0
  %419 = vmatpush1.msra.mxu0 0.0
  %420 = vmatprep.subr.mxu0 0.0
  %421 = vmatpush1.msra.mxu0 0.0
  %422 = vmatprep.subr.mxu0 0.0
  %423 = vmatpush1.msra.mxu0 0.0
  %424 = vmatprep.subr.mxu0 0.0
  %425 = vmatpush1.msra.mxu0 0.0
  %426 = vmatprep.subr.mxu0 0.0
  %427 = vmatpush1.msra.mxu0 0.0
  %428 = vmatprep.subr.mxu0 0.0
  %429 = vmatpush1.msra.mxu0 0.0
  %430 = vmatprep.subr.mxu0 0.0
  %431 = vmatpush1.msra.mxu0 0.0
  %432 = vmatprep.subr.mxu0 0.0
  %433 = vmatpush1.msra.mxu0 0.0
  %434 = vmatprep.subr.mxu0 0.0
  %435 = vmatpush1.msra.mxu0 0.0
  %436 = vmatprep.subr.mxu0 0.0
  %437 = vmatpush1.msra.mxu0 0.0
  %438 = vmatprep.subr.mxu0 0.0
  %439 = vmatpush1.msra.mxu0 0.0
  %440 = vmatprep.subr.mxu0 0.0
  %441 = vmatpush1.msra.mxu0 0.0
  %442 = vmatprep.subr.mxu0 0.0
  %443 = vmatpush1.msra.mxu0 0.0
  %444 = vmatprep.subr.mxu0 0.0
  %445 = vmatpush1.msra.mxu0 0.0
  %446 = vmatprep.subr.mxu0 0.0
  %447 = vmatpush1.msra.mxu0 0.0
  %448 = vmatprep.mubr.f32.mxu0 0.0
  %449 = vmatmul.mubr.f32.gmra.mrb[0].mxu0 %v382
  %v450 = vpop.f32.mrb[0].mxu0
  %v451 = vadd.f32 0.0, %v450
  %v452 = vpop.f32.mrb[0].mxu0
  %453 = vdwg.mxu0
  %v454 = vadd.f32 %v148, %v451
  %v455 = vmul.f32 %v454, %v185
  %v456 = vtanh.pop %v455
  %v457 = vadd.f32 %v456, 1.0
  %v458 = vmul.f32 %v457, 0.5
  %v459 = vmul.f32 %v458, %v372
  %461 = vrot.lane.b32.xlu0 %v456, 64
  %v462 = vpop.permute.xlu0 %461
  %v464 = vmul.f32 %v458, %v462
  %466 = vrot.lane.b32.xlu0 %v464, 32
  %v467 = vpop.permute.xlu0 %466
  %v469 = vadd.f32 %v459, %v467
  %v470 = vtanh.pop %v469
  %472 = vrot.lane.b32.xlu0 %v470, 64
  %v473 = vpop.permute.xlu0 %472
  %v475 = vmul.f32 %v458, %v473
  %477 = vrot.lane.b32.xlu0 %v475, 32
  %v478 = vpop.permute.xlu0 %477
  %v479 = vsel %vm186, %v478, 0
  %481 = vmatprep.subr.mxu0 0.0
  %482 = vmatpush1.msra.mxu0 %v176
  %483 = vmatprep.subr.mxu0 0.0
  %484 = vmatpush1.msra.mxu0 %v177
  %485 = vmatprep.subr.mxu0 0.0
  %486 = vmatpush1.msra.mxu0 %v178
  %487 = vmatprep.subr.mxu0 0.0
  %488 = vmatpush1.msra.mxu0 %v179
  %489 = vmatprep.subr.mxu0 0.0
  %490 = vmatpush1.msra.mxu0 0.0
  %491 = vmatprep.subr.mxu0 0.0
  %492 = vmatpush1.msra.mxu0 0.0
  %493 = vmatprep.subr.mxu0 0.0
  %494 = vmatpush1.msra.mxu0 0.0
  %495 = vmatprep.subr.mxu0 0.0
  %496 = vmatpush1.msra.mxu0 0.0
  %497 = vmatprep.subr.mxu0 0.0
  %498 = vmatpush1.msra.mxu0 0.0
  %499 = vmatprep.subr.mxu0 0.0
  %500 = vmatpush1.msra.mxu0 0.0
  %501 = vmatprep.subr.mxu0 0.0
  %502 = vmatpush1.msra.mxu0 0.0
  %503 = vmatprep.subr.mxu0 0.0
  %504 = vmatpush1.msra.mxu0 0.0
  %505 = vmatprep.subr.mxu0 0.0
  %506 = vmatpush1.msra.mxu0 0.0
  %507 = vmatprep.subr.mxu0 0.0
  %508 = vmatpush1.msra.mxu0 0.0
  %509 = vmatprep.subr.mxu0 0.0
  %510 = vmatpush1.msra.mxu0 0.0
  %511 = vmatprep.subr.mxu0 0.0
  %512 = vmatpush1.msra.mxu0 0.0
  %513 = vmatprep.subr.mxu0 0.0
  %514 = vmatpush1.msra.mxu0 0.0
  %515 = vmatprep.subr.mxu0 0.0
  %516 = vmatpush1.msra.mxu0 0.0
  %517 = vmatprep.subr.mxu0 0.0
  %518 = vmatpush1.msra.mxu0 0.0
  %519 = vmatprep.subr.mxu0 0.0
  %520 = vmatpush1.msra.mxu0 0.0
  %521 = vmatprep.subr.mxu0 0.0
  %522 = vmatpush1.msra.mxu0 0.0
  %523 = vmatprep.subr.mxu0 0.0
  %524 = vmatpush1.msra.mxu0 0.0
  %525 = vmatprep.subr.mxu0 0.0
  %526 = vmatpush1.msra.mxu0 0.0
  %527 = vmatprep.subr.mxu0 0.0
  %528 = vmatpush1.msra.mxu0 0.0
  %529 = vmatprep.subr.mxu0 0.0
  %530 = vmatpush1.msra.mxu0 0.0
  %531 = vmatprep.subr.mxu0 0.0
  %532 = vmatpush1.msra.mxu0 0.0
  %533 = vmatprep.subr.mxu0 0.0
  %534 = vmatpush1.msra.mxu0 0.0
  %535 = vmatprep.subr.mxu0 0.0
  %536 = vmatpush1.msra.mxu0 0.0
  %537 = vmatprep.subr.mxu0 0.0
  %538 = vmatpush1.msra.mxu0 0.0
  %539 = vmatprep.subr.mxu0 0.0
  %540 = vmatpush1.msra.mxu0 0.0
  %541 = vmatprep.subr.mxu0 0.0
  %542 = vmatpush1.msra.mxu0 0.0
  %543 = vmatprep.subr.mxu0 0.0
  %544 = vmatpush1.msra.mxu0 0.0
  %545 = vmatprep.mubr.f32.mxu0 0.0
  %546 = vmatmul.mubr.f32.gmra.mrb[0].mxu0 %v479
  %v547 = vpop.f32.mrb[0].mxu0
  %v548 = vadd.f32 0.0, %v547
  %v549 = vpop.f32.mrb[0].mxu0
  %550 = vdwg.mxu0
  %v551 = vadd.f32 %v153, %v548
  %v552 = vmul.f32 %v551, %v185
  %v553 = vtanh.pop %v552
  %v554 = vadd.f32 %v553, 1.0
  %v555 = vmul.f32 %v554, 0.5
  %v556 = vmul.f32 %v555, %v469
  %558 = vrot.lane.b32.xlu0 %v553, 64
  %v559 = vpop.permute.xlu0 %558
  %v561 = vmul.f32 %v555, %v559
  %563 = vrot.lane.b32.xlu0 %v561, 32
  %v564 = vpop.permute.xlu0 %563
  %v566 = vadd.f32 %v556, %v564
  %v567 = vtanh.pop %v566
  %569 = vrot.lane.b32.xlu0 %v567, 64
  %v570 = vpop.permute.xlu0 %569
  %v572 = vmul.f32 %v555, %v570
  %574 = vrot.lane.b32.xlu0 %v572, 32
  %v575 = vpop.permute.xlu0 %574
  %v576 = vsel %vm186, %v575, 0
  %578 = vmatprep.subr.mxu0 0.0
  %579 = vmatpush1.msra.mxu0 %v176
  %580 = vmatprep.subr.mxu0 0.0
  %581 = vmatpush1.msra.mxu0 %v177
  %582 = vmatprep.subr.mxu0 0.0
  %583 = vmatpush1.msra.mxu0 %v178
  %584 = vmatprep.subr.mxu0 0.0
  %585 = vmatpush1.msra.mxu0 %v179
  %586 = vmatprep.subr.mxu0 0.0
  %587 = vmatpush1.msra.mxu0 0.0
  %588 = vmatprep.subr.mxu0 0.0
  %589 = vmatpush1.msra.mxu0 0.0
  %590 = vmatprep.subr.mxu0 0.0
  %591 = vmatpush1.msra.mxu0 0.0
  %592 = vmatprep.subr.mxu0 0.0
  %593 = vmatpush1.msra.mxu0 0.0
  %594 = vmatprep.subr.mxu0 0.0
  %595 = vmatpush1.msra.mxu0 0.0
  %596 = vmatprep.subr.mxu0 0.0
  %597 = vmatpush1.msra.mxu0 0.0
  %598 = vmatprep.subr.mxu0 0.0
  %599 = vmatpush1.msra.mxu0 0.0
  %600 = vmatprep.subr.mxu0 0.0
  %601 = vmatpush1.msra.mxu0 0.0
  %602 = vmatprep.subr.mxu0 0.0
  %603 = vmatpush1.msra.mxu0 0.0
  %604 = vmatprep.subr.mxu0 0.0
  %605 = vmatpush1.msra.mxu0 0.0
  %606 = vmatprep.subr.mxu0 0.0
  %607 = vmatpush1.msra.mxu0 0.0
  %608 = vmatprep.subr.mxu0 0.0
  %609 = vmatpush1.msra.mxu0 0.0
  %610 = vmatprep.subr.mxu0 0.0
  %611 = vmatpush1.msra.mxu0 0.0
  %612 = vmatprep.subr.mxu0 0.0
  %613 = vmatpush1.msra.mxu0 0.0
  %614 = vmatprep.subr.mxu0 0.0
  %615 = vmatpush1.msra.mxu0 0.0
  %616 = vmatprep.subr.mxu0 0.0
  %617 = vmatpush1.msra.mxu0 0.0
  %618 = vmatprep.subr.mxu0 0.0
  %619 = vmatpush1.msra.mxu0 0.0
  %620 = vmatprep.subr.mxu0 0.0
  %621 = vmatpush1.msra.mxu0 0.0
  %622 = vmatprep.subr.mxu0 0.0
  %623 = vmatpush1.msra.mxu0 0.0
  %624 = vmatprep.subr.mxu0 0.0
  %625 = vmatpush1.msra.mxu0 0.0
  %626 = vmatprep.subr.mxu0 0.0
  %627 = vmatpush1.msra.mxu0 0.0
  %628 = vmatprep.subr.mxu0 0.0
  %629 = vmatpush1.msra.mxu0 0.0
  %630 = vmatprep.subr.mxu0 0.0
  %631 = vmatpush1.msra.mxu0 0.0
  %632 = vmatprep.subr.mxu0 0.0
  %633 = vmatpush1.msra.mxu0 0.0
  %634 = vmatprep.subr.mxu0 0.0
  %635 = vmatpush1.msra.mxu0 0.0
  %636 = vmatprep.subr.mxu0 0.0
  %637 = vmatpush1.msra.mxu0 0.0
  %638 = vmatprep.subr.mxu0 0.0
  %639 = vmatpush1.msra.mxu0 0.0
  %640 = vmatprep.subr.mxu0 0.0
  %641 = vmatpush1.msra.mxu0 0.0
  %642 = vmatprep.mubr.f32.mxu0 0.0
  %643 = vmatmul.mubr.f32.gmra.mrb[0].mxu0 %v576
  %v644 = vpop.f32.mrb[0].mxu0
  %v645 = vadd.f32 0.0, %v644
  %v646 = vpop.f32.mrb[0].mxu0
  %647 = vdwg.mxu0
  %v648 = vadd.f32 %v158, %v645
  %v649 = vmul.f32 %v648, %v185
  %v650 = vtanh.pop %v649
  %v651 = vadd.f32 %v650, 1.0
  %v652 = vmul.f32 %v651, 0.5
  %v653 = vmul.f32 %v652, %v566
  %655 = vrot.lane.b32.xlu0 %v650, 64
  %v656 = vpop.permute.xlu0 %655
  %v658 = vmul.f32 %v652, %v656
  %660 = vrot.lane.b32.xlu0 %v658, 32
  %v661 = vpop.permute.xlu0 %660
  %v663 = vadd.f32 %v653, %v661
  %v664 = vtanh.pop %v663
  %666 = vrot.lane.b32.xlu0 %v664, 64
  %v667 = vpop.permute.xlu0 %666
  %v669 = vmul.f32 %v652, %v667
  %671 = vrot.lane.b32.xlu0 %v669, 32
  %v672 = vpop.permute.xlu0 %671
  %v673 = vsel %vm186, %v672, 0
  %675 = vmatprep.subr.mxu0 0.0
  %676 = vmatpush1.msra.mxu0 %v176
  %677 = vmatprep.subr.mxu0 0.0
  %678 = vmatpush1.msra.mxu0 %v177
  %679 = vmatprep.subr.mxu0 0.0
  %680 = vmatpush1.msra.mxu0 %v178
  %681 = vmatprep.subr.mxu0 0.0
  %682 = vmatpush1.msra.mxu0 %v179
  %683 = vmatprep.subr.mxu0 0.0
  %684 = vmatpush1.msra.mxu0 0.0
  %685 = vmatprep.subr.mxu0 0.0
  %686 = vmatpush1.msra.mxu0 0.0
  %687 = vmatprep.subr.mxu0 0.0
  %688 = vmatpush1.msra.mxu0 0.0
  %689 = vmatprep.subr.mxu0 0.0
  %690 = vmatpush1.msra.mxu0 0.0
  %691 = vmatprep.subr.mxu0 0.0
  %692 = vmatpush1.msra.mxu0 0.0
  %693 = vmatprep.subr.mxu0 0.0
  %694 = vmatpush1.msra.mxu0 0.0
  %695 = vmatprep.subr.mxu0 0.0
  %696 = vmatpush1.msra.mxu0 0.0
  %697 = vmatprep.subr.mxu0 0.0
  %698 = vmatpush1.msra.mxu0 0.0
  %699 = vmatprep.subr.mxu0 0.0
  %700 = vmatpush1.msra.mxu0 0.0
  %701 = vmatprep.subr.mxu0 0.0
  %702 = vmatpush1.msra.mxu0 0.0
  %703 = vmatprep.subr.mxu0 0.0
  %704 = vmatpush1.msra.mxu0 0.0
  %705 = vmatprep.subr.mxu0 0.0
  %706 = vmatpush1.msra.mxu0 0.0
  %707 = vmatprep.subr.mxu0 0.0
  %708 = vmatpush1.msra.mxu0 0.0
  %709 = vmatprep.subr.mxu0 0.0
  %710 = vmatpush1.msra.mxu0 0.0
  %711 = vmatprep.subr.mxu0 0.0
  %712 = vmatpush1.msra.mxu0 0.0
  %713 = vmatprep.subr.mxu0 0.0
  %714 = vmatpush1.msra.mxu0 0.0
  %715 = vmatprep.subr.mxu0 0.0
  %716 = vmatpush1.msra.mxu0 0.0
  %717 = vmatprep.subr.mxu0 0.0
  %718 = vmatpush1.msra.mxu0 0.0
  %719 = vmatprep.subr.mxu0 0.0
  %720 = vmatpush1.msra.mxu0 0.0
  %721 = vmatprep.subr.mxu0 0.0
  %722 = vmatpush1.msra.mxu0 0.0
  %723 = vmatprep.subr.mxu0 0.0
  %724 = vmatpush1.msra.mxu0 0.0
  %725 = vmatprep.subr.mxu0 0.0
  %726 = vmatpush1.msra.mxu0 0.0
  %727 = vmatprep.subr.mxu0 0.0
  %728 = vmatpush1.msra.mxu0 0.0
  %729 = vmatprep.subr.mxu0 0.0
  %730 = vmatpush1.msra.mxu0 0.0
  %731 = vmatprep.subr.mxu0 0.0
  %732 = vmatpush1.msra.mxu0 0.0
  %733 = vmatprep.subr.mxu0 0.0
  %734 = vmatpush1.msra.mxu0 0.0
  %735 = vmatprep.subr.mxu0 0.0
  %736 = vmatpush1.msra.mxu0 0.0
  %737 = vmatprep.subr.mxu0 0.0
  %738 = vmatpush1.msra.mxu0 0.0
  %739 = vmatprep.mubr.f32.mxu0 0.0
  %740 = vmatmul.mubr.f32.gmra.mrb[0].mxu0 %v673
  %v741 = vpop.f32.mrb[0].mxu0
  %v742 = vadd.f32 0.0, %v741
  %v743 = vpop.f32.mrb[0].mxu0
  %744 = vdwg.mxu0
  %v745 = vadd.f32 %v163, %v742
  %v746 = vmul.f32 %v745, %v185
  %v747 = vtanh.pop %v746
  %v748 = vadd.f32 %v747, 1.0
  %v749 = vmul.f32 %v748, 0.5
  %v750 = vmul.f32 %v749, %v663
  %752 = vrot.lane.b32.xlu0 %v747, 64
  %v753 = vpop.permute.xlu0 %752
  %v755 = vmul.f32 %v749, %v753
  %757 = vrot.lane.b32.xlu0 %v755, 32
  %v758 = vpop.permute.xlu0 %757
  %v760 = vadd.f32 %v750, %v758
  %v761 = vtanh.pop %v760
  %763 = vrot.lane.b32.xlu0 %v761, 64
  %v764 = vpop.permute.xlu0 %763
  %v766 = vmul.f32 %v749, %v764
  %768 = vrot.lane.b32.xlu0 %v766, 32
  %v769 = vpop.permute.xlu0 %768
  %v770 = vsel %vm186, %v769, 0
  %772 = vmatprep.subr.mxu0 0.0
  %773 = vmatpush1.msra.mxu0 %v176
  %774 = vmatprep.subr.mxu0 0.0
  %775 = vmatpush1.msra.mxu0 %v177
  %776 = vmatprep.subr.mxu0 0.0
  %777 = vmatpush1.msra.mxu0 %v178
  %778 = vmatprep.subr.mxu0 0.0
  %779 = vmatpush1.msra.mxu0 %v179
  %780 = vmatprep.subr.mxu0 0.0
  %781 = vmatpush1.msra.mxu0 0.0
  %782 = vmatprep.subr.mxu0 0.0
  %783 = vmatpush1.msra.mxu0 0.0
  %784 = vmatprep.subr.mxu0 0.0
  %785 = vmatpush1.msra.mxu0 0.0
  %786 = vmatprep.subr.mxu0 0.0
  %787 = vmatpush1.msra.mxu0 0.0
  %788 = vmatprep.subr.mxu0 0.0
  %789 = vmatpush1.msra.mxu0 0.0
  %790 = vmatprep.subr.mxu0 0.0
  %791 = vmatpush1.msra.mxu0 0.0
  %792 = vmatprep.subr.mxu0 0.0
  %793 = vmatpush1.msra.mxu0 0.0
  %794 = vmatprep.subr.mxu0 0.0
  %795 = vmatpush1.msra.mxu0 0.0
  %796 = vmatprep.subr.mxu0 0.0
  %797 = vmatpush1.msra.mxu0 0.0
  %798 = vmatprep.subr.mxu0 0.0
  %799 = vmatpush1.msra.mxu0 0.0
  %800 = vmatprep.subr.mxu0 0.0
  %801 = vmatpush1.msra.mxu0 0.0
  %802 = vmatprep.subr.mxu0 0.0
  %803 = vmatpush1.msra.mxu0 0.0
  %804 = vmatprep.subr.mxu0 0.0
  %805 = vmatpush1.msra.mxu0 0.0
  %806 = vmatprep.subr.mxu0 0.0
  %807 = vmatpush1.msra.mxu0 0.0
  %808 = vmatprep.subr.mxu0 0.0
  %809 = vmatpush1.msra.mxu0 0.0
  %810 = vmatprep.subr.mxu0 0.0
  %811 = vmatpush1.msra.mxu0 0.0
  %812 = vmatprep.subr.mxu0 0.0
  %813 = vmatpush1.msra.mxu0 0.0
  %814 = vmatprep.subr.mxu0 0.0
  %815 = vmatpush1.msra.mxu0 0.0
  %816 = vmatprep.subr.mxu0 0.0
  %817 = vmatpush1.msra.mxu0 0.0
  %818 = vmatprep.subr.mxu0 0.0
  %819 = vmatpush1.msra.mxu0 0.0
  %820 = vmatprep.subr.mxu0 0.0
  %821 = vmatpush1.msra.mxu0 0.0
  %822 = vmatprep.subr.mxu0 0.0
  %823 = vmatpush1.msra.mxu0 0.0
  %824 = vmatprep.subr.mxu0 0.0
  %825 = vmatpush1.msra.mxu0 0.0
  %826 = vmatprep.subr.mxu0 0.0
  %827 = vmatpush1.msra.mxu0 0.0
  %828 = vmatprep.subr.mxu0 0.0
  %829 = vmatpush1.msra.mxu0 0.0
  %830 = vmatprep.subr.mxu0 0.0
  %831 = vmatpush1.msra.mxu0 0.0
  %832 = vmatprep.subr.mxu0 0.0
  %833 = vmatpush1.msra.mxu0 0.0
  %834 = vmatprep.subr.mxu0 0.0
  %835 = vmatpush1.msra.mxu0 0.0
  %836 = vmatprep.mubr.f32.mxu0 0.0
  %837 = vmatmul.mubr.f32.gmra.mrb[0].mxu0 %v770
  %v838 = vpop.f32.mrb[0].mxu0
  %v839 = vadd.f32 0.0, %v838
  %v840 = vpop.f32.mrb[0].mxu0
  %841 = vdwg.mxu0
  %v842 = vadd.f32 %v168, %v839
  %v843 = vmul.f32 %v842, %v185
  %v844 = vtanh.pop %v843
  %v845 = vadd.f32 %v844, 1.0
  %v846 = vmul.f32 %v845, 0.5
  %v847 = vmul.f32 %v846, %v760
  %849 = vrot.lane.b32.xlu0 %v844, 64
  %v850 = vpop.permute.xlu0 %849
  %v852 = vmul.f32 %v846, %v850
  %854 = vrot.lane.b32.xlu0 %v852, 32
  %v855 = vpop.permute.xlu0 %854
  %v857 = vadd.f32 %v847, %v855
  %v858 = vtanh.pop %v857
  %860 = vrot.lane.b32.xlu0 %v858, 64
  %v861 = vpop.permute.xlu0 %860
  %v863 = vmul.f32 %v846, %v861
  %865 = vrot.lane.b32.xlu0 %v863, 32
  %v866 = vpop.permute.xlu0 %865
  %v867 = vsel %vm186, %v866, 0
  %869 = vmatprep.subr.mxu0 0.0
  %870 = vmatpush1.msra.mxu0 %v176
  %871 = vmatprep.subr.mxu0 0.0
  %872 = vmatpush1.msra.mxu0 %v177
  %873 = vmatprep.subr.mxu0 0.0
  %874 = vmatpush1.msra.mxu0 %v178
  %875 = vmatprep.subr.mxu0 0.0
  %876 = vmatpush1.msra.mxu0 %v179
  %877 = vmatprep.subr.mxu0 0.0
  %878 = vmatpush1.msra.mxu0 0.0
  %879 = vmatprep.subr.mxu0 0.0
  %880 = vmatpush1.msra.mxu0 0.0
  %881 = vmatprep.subr.mxu0 0.0
  %882 = vmatpush1.msra.mxu0 0.0
  %883 = vmatprep.subr.mxu0 0.0
  %884 = vmatpush1.msra.mxu0 0.0
  %885 = vmatprep.subr.mxu0 0.0
  %886 = vmatpush1.msra.mxu0 0.0
  %887 = vmatprep.subr.mxu0 0.0
  %888 = vmatpush1.msra.mxu0 0.0
  %889 = vmatprep.subr.mxu0 0.0
  %890 = vmatpush1.msra.mxu0 0.0
  %891 = vmatprep.subr.mxu0 0.0
  %892 = vmatpush1.msra.mxu0 0.0
  %893 = vmatprep.subr.mxu0 0.0
  %894 = vmatpush1.msra.mxu0 0.0
  %895 = vmatprep.subr.mxu0 0.0
  %896 = vmatpush1.msra.mxu0 0.0
  %897 = vmatprep.subr.mxu0 0.0
  %898 = vmatpush1.msra.mxu0 0.0
  %899 = vmatprep.subr.mxu0 0.0
  %900 = vmatpush1.msra.mxu0 0.0
  %901 = vmatprep.subr.mxu0 0.0
  %902 = vmatpush1.msra.mxu0 0.0
  %903 = vmatprep.subr.mxu0 0.0
  %904 = vmatpush1.msra.mxu0 0.0
  %905 = vmatprep.subr.mxu0 0.0
  %906 = vmatpush1.msra.mxu0 0.0
  %907 = vmatprep.subr.mxu0 0.0
  %908 = vmatpush1.msra.mxu0 0.0
  %909 = vmatprep.subr.mxu0 0.0
  %910 = vmatpush1.msra.mxu0 0.0
  %911 = vmatprep.subr.mxu0 0.0
  %912 = vmatpush1.msra.mxu0 0.0
  %913 = vmatprep.subr.mxu0 0.0
  %914 = vmatpush1.msra.mxu0 0.0
  %915 = vmatprep.subr.mxu0 0.0
  %916 = vmatpush1.msra.mxu0 0.0
  %917 = vmatprep.subr.mxu0 0.0
  %918 = vmatpush1.msra.mxu0 0.0
  %919 = vmatprep.subr.mxu0 0.0
  %920 = vmatpush1.msra.mxu0 0.0
  %921 = vmatprep.subr.mxu0 0.0
  %922 = vmatpush1.msra.mxu0 0.0
  %923 = vmatprep.subr.mxu0 0.0
  %924 = vmatpush1.msra.mxu0 0.0
  %925 = vmatprep.subr.mxu0 0.0
  %926 = vmatpush1.msra.mxu0 0.0
  %927 = vmatprep.subr.mxu0 0.0
  %928 = vmatpush1.msra.mxu0 0.0
  %929 = vmatprep.subr.mxu0 0.0
  %930 = vmatpush1.msra.mxu0 0.0
  %931 = vmatprep.subr.mxu0 0.0
  %932 = vmatpush1.msra.mxu0 0.0
  %933 = vmatprep.mubr.f32.mxu0 0.0
  %934 = vmatmul.mubr.f32.gmra.mrb[0].mxu0 %v867
  %v935 = vpop.f32.mrb[0].mxu0
  %v936 = vadd.f32 0.0, %v935
  %v937 = vpop.f32.mrb[0].mxu0
  %938 = vdwg.mxu0
  %v939 = vadd.f32 %v173, %v936
  %v940 = vmul.f32 %v939, %v185
  %v941 = vtanh.pop %v940
  %v942 = vadd.f32 %v941, 1.0
  %v943 = vmul.f32 %v942, 0.5
  %v944 = vmul.f32 %v943, %v857
  %946 = vrot.lane.b32.xlu0 %v941, 64
  %v947 = vpop.permute.xlu0 %946
  %v949 = vmul.f32 %v943, %v947
  %951 = vrot.lane.b32.xlu0 %v949, 32
  %v952 = vpop.permute.xlu0 %951
  %v954 = vadd.f32 %v944, %v952
  %v955 = vtanh.pop %v954
  %957 = vrot.lane.b32.xlu0 %v955, 64
  %v958 = vpop.permute.xlu0 %957
  %v960 = vmul.f32 %v943, %v958
  %962 = vrot.lane.b32.xlu0 %v378, 64
  %v963 = vpop.permute.xlu0 %962
  %965 = vrot.lane.b32.xlu0 %v475, 96
  %v966 = vpop.permute.xlu0 %965
  %969 = vrot.lane.b32.xlu0 %v766, 64
  %v970 = vpop.permute.xlu0 %969
  %972 = vrot.lane.b32.xlu0 %v863, 96
  %v973 = vpop.permute.xlu0 %972
  %v975 = vsel %vm186, %v284, %v963
  %vm976 = vcmask 523264
  %v977 = vsel %vm976, %v975, %v966
  %vm978 = vcmask 785408
  %v979 = vsel %vm978, %v977, %v572
  %v980 = vsel %vm186, %v672, %v970
  %v981 = vsel %vm976, %v980, %v973
  %v982 = vsel %vm978, %v981, %v960
  %v983 = vld [vmem:[%s4] sm:$0xff]
  %v984 = vld [vmem:[%s4 + $0x8] sm:$0xff]
  %v985 = vld [vmem:[%s4 + $0x10] sm:$0xff]
  %v986 = vld [vmem:[%s4 + $0x18] sm:$0xff]
  %v987 = vld [vmem:[%s4 + $0x20] sm:$0xff]
  %v988 = vld [vmem:[%s4 + $0x28] sm:$0xff]
  %v989 = vld [vmem:[%s4 + $0x30] sm:$0xff]
  %v990 = vld [vmem:[%s4 + $0x38] sm:$0xff]
  %v991 = vld [vmem:[%s4 + $0x40] sm:$0xff]
  %v992 = vld [vmem:[%s4 + $0x48] sm:$0xff]
  %v993 = vld [vmem:[%s4 + $0x50] sm:$0xff]
  %v994 = vld [vmem:[%s4 + $0x58] sm:$0xff]
  %v995 = vld [vmem:[%s4 + $0x60] sm:$0xff]
  %v996 = vld [vmem:[%s4 + $0x68] sm:$0xff]
  %v997 = vld [vmem:[%s4 + $0x70] sm:$0xff]
  %v998 = vld [vmem:[%s4 + $0x78] sm:$0xff]
  %v999 = vld [vmem:[%s4 + $0x80] sm:$0xff]
  %v1000 = vld [vmem:[%s4 + $0x88] sm:$0xff]
  %v1001 = vld [vmem:[%s4 + $0x90] sm:$0xff]
  %v1002 = vld [vmem:[%s4 + $0x98] sm:$0xff]
  %v1003 = vld [vmem:[%s4 + $0xa0] sm:$0xff]
  %v1004 = vld [vmem:[%s4 + $0xa8] sm:$0xff]
  %v1005 = vld [vmem:[%s4 + $0xb0] sm:$0xff]
  %v1006 = vld [vmem:[%s4 + $0xb8] sm:$0xff]
  %v1007 = vld [vmem:[%s4 + $0xc0] sm:$0xff]
  %v1008 = vld [vmem:[%s4 + $0xc8] sm:$0xff]
  %v1009 = vld [vmem:[%s4 + $0xd0] sm:$0xff]
  %v1010 = vld [vmem:[%s4 + $0xd8] sm:$0xff]
  %v1011 = vld [vmem:[%s4 + $0xe0] sm:$0xff]
  %v1012 = vld [vmem:[%s4 + $0xe8] sm:$0xff]
  %v1013 = vld [vmem:[%s4 + $0xf0] sm:$0xff]
  %v1014 = vld [vmem:[%s4 + $0xf8] sm:$0xff]
  %v1015 = vld [vmem:[%s5] sm:$0x1]
  %v1017 = vlaneseq
  %v1018 = vshrl.u32 %v1017, 7
  %v1019 = vsub.s32 0, %v1018
  %v1020 = vrot.slane %v1015, %v1019
  %1022 = vmatprep.subr.mxu0 0.0
  %1023 = vmatpush1.msra.mxu0 %v983
  %1024 = vmatprep.subr.mxu0 0.0
  %1025 = vmatpush1.msra.mxu0 %v984
  %1026 = vmatprep.subr.mxu0 0.0
  %1027 = vmatpush1.msra.mxu0 %v985
  %1028 = vmatprep.subr.mxu0 0.0
  %1029 = vmatpush1.msra.mxu0 %v986
  %1030 = vmatprep.subr.mxu0 0.0
  %1031 = vmatpush1.msra.mxu0 %v987
  %1032 = vmatprep.subr.mxu0 0.0
  %1033 = vmatpush1.msra.mxu0 %v988
  %1034 = vmatprep.subr.mxu0 0.0
  %1035 = vmatpush1.msra.mxu0 %v989
  %1036 = vmatprep.subr.mxu0 0.0
  %1037 = vmatpush1.msra.mxu0 %v990
  %1038 = vmatprep.subr.mxu0 0.0
  %1039 = vmatpush1.msra.mxu0 %v991
  %1040 = vmatprep.subr.mxu0 0.0
  %1041 = vmatpush1.msra.mxu0 %v992
  %1042 = vmatprep.subr.mxu0 0.0
  %1043 = vmatpush1.msra.mxu0 %v993
  %1044 = vmatprep.subr.mxu0 0.0
  %1045 = vmatpush1.msra.mxu0 %v994
  %1046 = vmatprep.subr.mxu0 0.0
  %1047 = vmatpush1.msra.mxu0 %v995
  %1048 = vmatprep.subr.mxu0 0.0
  %1049 = vmatpush1.msra.mxu0 %v996
  %1050 = vmatprep.subr.mxu0 0.0
  %1051 = vmatpush1.msra.mxu0 %v997
  %1052 = vmatprep.subr.mxu0 0.0
  %1053 = vmatpush1.msra.mxu0 %v998
  %1054 = vmatprep.subr.mxu0 0.0
  %1055 = vmatpush1.msra.mxu0 %v999
  %1056 = vmatprep.subr.mxu0 0.0
  %1057 = vmatpush1.msra.mxu0 %v1000
  %1058 = vmatprep.subr.mxu0 0.0
  %1059 = vmatpush1.msra.mxu0 %v1001
  %1060 = vmatprep.subr.mxu0 0.0
  %1061 = vmatpush1.msra.mxu0 %v1002
  %1062 = vmatprep.subr.mxu0 0.0
  %1063 = vmatpush1.msra.mxu0 %v1003
  %1064 = vmatprep.subr.mxu0 0.0
  %1065 = vmatpush1.msra.mxu0 %v1004
  %1066 = vmatprep.subr.mxu0 0.0
  %1067 = vmatpush1.msra.mxu0 %v1005
  %1068 = vmatprep.subr.mxu0 0.0
  %1069 = vmatpush1.msra.mxu0 %v1006
  %1070 = vmatprep.subr.mxu0 0.0
  %1071 = vmatpush1.msra.mxu0 %v1007
  %1072 = vmatprep.subr.mxu0 0.0
  %1073 = vmatpush1.msra.mxu0 %v1008
  %1074 = vmatprep.subr.mxu0 0.0
  %1075 = vmatpush1.msra.mxu0 %v1009
  %1076 = vmatprep.subr.mxu0 0.0
  %1077 = vmatpush1.msra.mxu0 %v1010
  %1078 = vmatprep.subr.mxu0 0.0
  %1079 = vmatpush1.msra.mxu0 %v1011
  %1080 = vmatprep.subr.mxu0 0.0
  %1081 = vmatpush1.msra.mxu0 %v1012
  %1082 = vmatprep.subr.mxu0 0.0
  %1083 = vmatpush1.msra.mxu0 %v1013
  %1084 = vmatprep.subr.mxu0 0.0
  %1085 = vmatpush1.msra.mxu0 %v1014
  %1086 = vmatprep.mubr.f32.mxu0 %v982
  %1087 = vmatmul.mubr.f32.gmra.mrb[0].mxu0 %v979
  %v1088 = vpop.f32.mrb[0].mxu0
  %v1089 = vadd.f32 %v1020, %v1088
  %v1090 = vpop.f32.mrb[0].mxu0
  %1091 = vdwg.mxu0
  %v1092 = vmax.f32 %v1089, 0.0
  %v1093 = vld [vmem:[%s6] sm:$0xff]
  %v1094 = vld [vmem:[%s6 + $0x8] sm:$0xff]
  %v1095 = vld [vmem:[%s6 + $0x10] sm:$0xff]
  %v1096 = vld [vmem:[%s6 + $0x18] sm:$0xff]
  %v1097 = vld [vmem:[%s6 + $0x20] sm:$0xff]
  %v1098 = vld [vmem:[%s6 + $0x28] sm:$0xff]
  %v1099 = vld [vmem:[%s6 + $0x30] sm:$0xff]
  %v1100 = vld [vmem:[%s6 + $0x38] sm:$0xff]
  %v1101 = vld [vmem:[%s7] sm:$0x1]
  %v1103 = vlaneseq
  %v1104 = vshrl.u32 %v1103, 7
  %v1105 = vsub.s32 0, %v1104
  %v1106 = vrot.slane %v1101, %v1105
  %v1109 = vsel %vm976, %v1092, 0
  %1111 = vmatprep.subr.mxu0 0.0
  %1112 = vmatpush1.msra.mxu0 %v1093
  %1113 = vmatprep.subr.mxu0 0.0
  %1114 = vmatpush1.msra.mxu0 %v1094
  %1115 = vmatprep.subr.mxu0 0.0
  %1116 = vmatpush1.msra.mxu0 %v1095
  %1117 = vmatprep.subr.mxu0 0.0
  %1118 = vmatpush1.msra.mxu0 %v1096
  %1119 = vmatprep.subr.mxu0 0.0
  %1120 = vmatpush1.msra.mxu0 %v1097
  %1121 = vmatprep.subr.mxu0 0.0
  %1122 = vmatpush1.msra.mxu0 %v1098
  %1123 = vmatprep.subr.mxu0 0.0
  %1124 = vmatpush1.msra.mxu0 %v1099
  %1125 = vmatprep.subr.mxu0 0.0
  %1126 = vmatpush1.msra.mxu0 %v1100
  %1127 = vmatprep.subr.mxu0 0.0
  %1128 = vmatpush1.msra.mxu0 0.0
  %1129 = vmatprep.subr.mxu0 0.0
  %1130 = vmatpush1.msra.mxu0 0.0
  %1131 = vmatprep.subr.mxu0 0.0
  %1132 = vmatpush1.msra.mxu0 0.0
  %1133 = vmatprep.subr.mxu0 0.0
  %1134 = vmatpush1.msra.mxu0 0.0
  %1135 = vmatprep.subr.mxu0 0.0
  %1136 = vmatpush1.msra.mxu0 0.0
  %1137 = vmatprep.subr.mxu0 0.0
  %1138 = vmatpush1.msra.mxu0 0.0
  %1139 = vmatprep.subr.mxu0 0.0
  %1140 = vmatpush1.msra.mxu0 0.0
  %1141 = vmatprep.subr.mxu0 0.0
  %1142 = vmatpush1.msra.mxu0 0.0
  %1143 = vmatprep.subr.mxu0 0.0
  %1144 = vmatpush1.msra.mxu0 0.0
  %1145 = vmatprep.subr.mxu0 0.0
  %1146 = vmatpush1.msra.mxu0 0.0
  %1147 = vmatprep.subr.mxu0 0.0
  %1148 = vmatpush1.msra.mxu0 0.0
  %1149 = vmatprep.subr.mxu0 0.0
  %1150 = vmatpush1.msra.mxu0 0.0
  %1151 = vmatprep.subr.mxu0 0.0
  %1152 = vmatpush1.msra.mxu0 0.0
  %1153 = vmatprep.subr.mxu0 0.0
  %1154 = vmatpush1.msra.mxu0 0.0
  %1155 = vmatprep.subr.mxu0 0.0
  %1156 = vmatpush1.msra.mxu0 0.0
  %1157 = vmatprep.subr.mxu0 0.0
  %1158 = vmatpush1.msra.mxu0 0.0
  %1159 = vmatprep.subr.mxu0 0.0
  %1160 = vmatpush1.msra.mxu0 0.0
  %1161 = vmatprep.subr.mxu0 0.0
  %1162 = vmatpush1.msra.mxu0 0.0
  %1163 = vmatprep.subr.mxu0 0.0
  %1164 = vmatpush1.msra.mxu0 0.0
  %1165 = vmatprep.subr.mxu0 0.0
  %1166 = vmatpush1.msra.mxu0 0.0
  %1167 = vmatprep.subr.mxu0 0.0
  %1168 = vmatpush1.msra.mxu0 0.0
  %1169 = vmatprep.subr.mxu0 0.0
  %1170 = vmatpush1.msra.mxu0 0.0
  %1171 = vmatprep.subr.mxu0 0.0
  %1172 = vmatpush1.msra.mxu0 0.0
  %1173 = vmatprep.subr.mxu0 0.0
  %1174 = vmatpush1.msra.mxu0 0.0
  %1175 = vmatprep.mubr.f32.mxu0 0.0
  %1176 = vmatmul.mubr.f32.gmra.mrb[0].mxu0 %v1109
  %v1177 = vpop.f32.mrb[0].mxu0
  %v1178 = vadd.f32 %v1106, %v1177
  %v1179 = vpop.f32.mrb[0].mxu0
  %1180 = vdwg.mxu0
  %1181 = vst [vmem:[%s8] sm:$0xff] %v1178
  // Predicated region
  $region34: #{build_ca1_forward.1} parent=0 // pred_check
    _
  $region35: #{build_ca1_forward.1} parent=0 // pred_check_branch
    %1183 = sbr.rel (0) target = $region37
  $region36: #{build_ca1_forward.1} parent=0 // pred_region
    _
  $region37: #{build_ca1_forward.1} parent=0 // pred_fallthru
    _
  // Predicated region
  $region38: #{build_ca1_forward.1} parent=0 // pred_check
    _
  $region39: #{build_ca1_forward.1} parent=0 // pred_check_branch
    %1185 = sbr.rel (0) target = $region41
  $region40: #{build_ca1_forward.1} parent=0 // pred_region
    _
  $region41: #{build_ca1_forward.1} parent=0 // pred_fallthru
    _

</llo_original>
